<compile_context>
chip_gen: v5e
topology: v5e:2x2
jax: 0.10.0
libtpu: 0.0.40
codegen_flags: <defaults>
</compile_context>

<pallas_src>
import functools

import numpy as np
import jax
import jax.numpy as jnp
from jax import lax
from jax.experimental import pallas as pl
from jax.experimental.pallas import tpu as pltpu

# ----------------------- model hyper-parameters ------------------------------
NF1 = 4            # num_filters_1
NF2 = 8            # num_filters_2
KSIZE = 3          # kernel_size
NFC = 32           # num_fc_units
H_IN = 28          # MNIST spatial size
C1OUT = H_IN - KSIZE + 1        # 26  conv1 valid output
P1OUT = C1OUT // 2              # 13  after 2x2/2 pool
C2OUT = P1OUT - KSIZE + 1       # 11
P2OUT = C2OUT // 2              # 5
CONV_OUT = NF2 * P2OUT * P2OUT  # 200
NCLASS = 10
NOUT = 128                      # lane-dense padded class dim

# lane widths of the packed (rows, batch, width*channels) activation slabs
L1 = C1OUT * NF1                # 104
L1P = P1OUT * NF1               # 52
L2 = C2OUT * NF2                # 88
L2P = P2OUT * NF2               # 40


# ----------------------- constant-slab layout ---------------------------------
def _slab_layout():
    offs = {}
    r = 0

    def add(name, rows):
        nonlocal r
        offs[name] = r
        r += ((rows + 7) // 8) * 8

    for ky in range(KSIZE):
        add(f"m1_{ky}", H_IN)           # (28, 104)
    for ky in range(KSIZE):
        add(f"m2_{ky}", L1P)            # (52, 88)
    add("sc1", L1)                      # (104, 104)
    add("sc2", L2)                      # (88, 80)
    add("w1r", P2OUT * L2P)             # (200, 32)
    add("w2", NFC)                      # (32, 128)
    return offs, r


_SLAB_OFFS, _SLAB_ROWS = _slab_layout()


# ----------------------- host-side constant construction ----------------------
def _col_pool_select(w, c, offset):
    """(w*c, (w//2)*c) 0/1 matrix: out lane jp*c+ch <- in lane (2*jp+offset)*c+ch."""
    wp = w // 2
    m = np.zeros((w * c, wp * c), np.float32)
    jp = np.repeat(np.arange(wp), c)
    ch = np.tile(np.arange(c), wp)
    m[(2 * jp + offset) * c + ch, jp * c + ch] = 1.0
    return m


def _band_weights(w, win):
    """Pack OIHW conv weights into per-ky banded matmul matrices.

    Activations live as (..., wpos*cin + ci) lane-dense rows.  With
      M[ky][(j+kx)*cin + ci, j*cout + co] = w[co, ci, ky, kx]
    the valid conv is:  out[.., r, j*cout+co] = sum_ky in[.., r+ky, :] @ M[ky].
    """
    cout, cin, k, _ = w.shape
    wo = win - k + 1
    j = np.arange(wo)
    kx = np.arange(k)
    ci = np.arange(cin)
    co = np.arange(cout)
    rows = ((j[:, None, None, None] + kx[None, :, None, None]) * cin
            + ci[None, None, :, None])
    cols = j[:, None, None, None] * cout + co[None, None, None, :]
    rows = np.broadcast_to(rows, (wo, k, cin, cout)).ravel().astype(np.int32)
    cols = np.broadcast_to(cols, (wo, k, cin, cout)).ravel().astype(np.int32)
    m = jnp.zeros((k, win * cin, wo * cout), jnp.float32)
    for ky in range(k):
        vals = jnp.broadcast_to(
            jnp.transpose(w[:, :, ky, :], (2, 1, 0))[None],   # [kx, ci, co]
            (wo, k, cin, cout)).reshape(-1)
        m = m.at[ky, rows, cols].set(vals)
    return m


def _pack_operands(params):
    """One bf16 weight slab (all matmul operands) + one f32 bias block."""
    m1 = _band_weights(params["conv1_w"].astype(jnp.float32), H_IN)    # (3, 28, 104)
    m2 = _band_weights(params["conv2_w"].astype(jnp.float32), P1OUT)   # (3, 52, 88)
    sc1 = jnp.asarray(np.concatenate(
        [_col_pool_select(C1OUT, NF1, 0), _col_pool_select(C1OUT, NF1, 1)], axis=1))
    sc2 = jnp.asarray(np.concatenate(
        [_col_pool_select(C2OUT, NF2, 0), _col_pool_select(C2OUT, NF2, 1)], axis=1))
    # fc1 rows permuted from PyTorch flatten order (co*25 + i*5 + j) to the
    # kernel's (row i, lane j*NF2 + co) layout, then flattened to (200, 32).
    w1r = (params["fc1_w"].astype(jnp.float32)
           .reshape(NF2, P2OUT, P2OUT, NFC)
           .transpose(1, 2, 0, 3)
           .reshape(P2OUT * P2OUT * NF2, NFC))
    w2 = jnp.pad(params["fc2_w"].astype(jnp.float32),
                 ((0, 0), (0, NOUT - NCLASS)))                          # (32, 128)

    slab = jnp.zeros((_SLAB_ROWS, NOUT), jnp.float32)

    def put(s, name, m):
        o = _SLAB_OFFS[name]
        return s.at[o:o + m.shape[0], :m.shape[1]].set(m)

    for ky in range(KSIZE):
        slab = put(slab, f"m1_{ky}", m1[ky])
        slab = put(slab, f"m2_{ky}", m2[ky])
    slab = put(slab, "sc1", sc1)
    slab = put(slab, "sc2", sc2)
    slab = put(slab, "w1r", w1r)
    slab = put(slab, "w2", w2)
    slab = slab.astype(jnp.bfloat16)

    biases = jnp.zeros((4, NOUT), jnp.float32)
    biases = biases.at[0, :L1].set(jnp.tile(params["conv1_b"].astype(jnp.float32), C1OUT))
    biases = biases.at[1, :L2].set(jnp.tile(params["conv2_b"].astype(jnp.float32), C2OUT))
    biases = biases.at[2, :NFC].set(params["fc1_b"].astype(jnp.float32))
    biases = biases.at[3, :].set(jnp.full((NOUT,), -1e30, jnp.float32))  # dead class lanes
    biases = biases.at[3, :NCLASS].set(params["fc2_b"].astype(jnp.float32))
    return slab, biases


# ----------------------- fused forward kernel ---------------------------------
def _fused_forward_kernel(x_ref, w_ref, b_ref, o_ref, *, tb):
    f32, bf16 = jnp.float32, jnp.bfloat16
    O = _SLAB_OFFS

    # (28, tb, 28) -> merged-row (28*tb, 28); row r of image b is merged row r*tb+b.
    x = x_ref[...].reshape(H_IN * tb, H_IN).astype(bf16)

    # ---- conv1 + bias + ReLU : 3 MXU matmuls, M = 26*tb -----------------------
    c1 = None
    for ky in range(KSIZE):
        xs = x[ky * tb:(ky + C1OUT) * tb, :]                       # contiguous rows
        w = w_ref[O[f"m1_{ky}"]:O[f"m1_{ky}"] + H_IN, :L1]         # (28, 104) bf16
        t = jnp.dot(xs, w, preferred_element_type=f32)
        c1 = t if c1 is None else c1 + t
    c1 = jnp.maximum(c1 + b_ref[0:1, :L1], 0.0)                    # (26*tb, 104) f32

    # ---- 2x2 / stride-2 max pool #1 -------------------------------------------
    c1 = c1.reshape(P1OUT, 2 * tb, L1)                             # rows (2p, 2p+1) adjacent
    rows = jnp.maximum(c1[:, :tb, :], c1[:, tb:, :])               # (13, tb, 104) row max
    rows = rows.reshape(P1OUT * tb, L1).astype(bf16)
    cp = jnp.dot(rows, w_ref[O["sc1"]:O["sc1"] + L1, :L1],
                 preferred_element_type=f32)                       # [even | odd] columns
    p1 = jnp.maximum(cp[:, :L1P], cp[:, L1P:L1]).astype(bf16)      # (13*tb, 52)

    # ---- conv2 + bias + ReLU : 3 MXU matmuls, M = 11*tb -----------------------
    c2 = None
    for ky in range(KSIZE):
        ps = p1[ky * tb:(ky + C2OUT) * tb, :]
        w = w_ref[O[f"m2_{ky}"]:O[f"m2_{ky}"] + L1P, :L2]          # (52, 88) bf16
        t = jnp.dot(ps, w, preferred_element_type=f32)
        c2 = t if c2 is None else c2 + t
    c2 = jnp.maximum(c2 + b_ref[1:2, :L2], 0.0)                    # (11*tb, 88) f32

    # ---- 2x2 / stride-2 max pool #2 (floor: row 10 dropped) -------------------
    c2 = c2[:2 * P2OUT * tb, :].reshape(P2OUT, 2 * tb, L2)
    rows2 = jnp.maximum(c2[:, :tb, :], c2[:, tb:, :])              # (5, tb, 88)
    rows2 = rows2.reshape(P2OUT * tb, L2).astype(bf16)
    cp2 = jnp.dot(rows2, w_ref[O["sc2"]:O["sc2"] + L2, :2 * L2P],
                  preferred_element_type=f32)
    p2 = jnp.maximum(cp2[:, :L2P], cp2[:, L2P:2 * L2P]).astype(bf16)   # (5*tb, 40)

    # nn.Dropout: identity at inference time (eval mode).

    # ---- fc1 + ReLU : 5 accumulated (tb,40)@(40,32) dots ----------------------
    h = None
    for i in range(P2OUT):
        off = O["w1r"] + i * L2P
        t = jnp.dot(p2[i * tb:(i + 1) * tb, :], w_ref[off:off + L2P, :NFC],
                    preferred_element_type=f32)
        h = t if h is None else h + t
    h = jnp.maximum(h + b_ref[2:3, :NFC], 0.0).astype(bf16)        # (tb, 32)

    # ---- fc2 + stable log_softmax (lane-dense 128-wide output) ----------------
    logits = jnp.dot(h, w_ref[O["w2"]:O["w2"] + NFC, :],
                     preferred_element_type=f32) + b_ref[3:4, :]   # pad lanes ~ -1e30
    mx = jnp.max(logits, axis=-1, keepdims=True)
    s = logits - mx
    lse = jnp.log(jnp.sum(jnp.exp(s), axis=-1, keepdims=True))
    o_ref[...] = s - lse                                           # (tb, 128)


# ----------------------- wrapper ----------------------------------------------
def _choose_tile(batch, batch_tile):
    n = max(1, -(-batch // batch_tile))
    if n == 1 and batch > 16:
        n = 2                          # let both v7x TensorCores get a grid step
    tb = -(-batch // n)
    tb = ((tb + 15) // 16) * 16        # 16-row alignment (packed bf16 sublanes)
    return tb, n


def mnist_convnet_forward(params, x, *, batch_tile=256):
    """x: (B, 1, 28, 28) float32 -> (B, 10) log-probabilities."""
    B = x.shape[0]
    tb, n = _choose_tile(B, batch_tile)
    bp = tb * n

    # (row, batch, width) layout so batch*rows collapse is layout-preserving.
    xt = jnp.transpose(x[:, 0, :, :].astype(jnp.float32), (1, 0, 2))    # (28, B, 28)
    if bp != B:
        xt = jnp.pad(xt, ((0, 0), (0, bp - B), (0, 0)))

    slab, biases = _pack_operands(params)
    kernel = functools.partial(_fused_forward_kernel, tb=tb)

    out = pl.pallas_call(
        kernel,
        out_shape=jax.ShapeDtypeStruct((bp, NOUT), jnp.float32),
        grid=(n,),
        in_specs=[
            pl.BlockSpec((H_IN, tb, H_IN), lambda i: (0, i, 0)),   # batch-tiled input
            pl.BlockSpec((_SLAB_ROWS, NOUT), lambda i: (0, 0)),    # packed bf16 weights
            pl.BlockSpec((4, NOUT), lambda i: (0, 0)),             # packed f32 biases
        ],
        out_specs=pl.BlockSpec((tb, NOUT), lambda i: (i, 0)),
        compiler_params=pltpu.CompilerParams(
            dimension_semantics=("parallel",),
            vmem_limit_bytes=48 * 1024 * 1024),
    )(xt, slab, biases)
    return out[:B, :NCLASS]


# ----------------------- pure-JAX reference (sanity check) --------------------
def reference_forward(params, x):
    def conv(a, w, b):
        y = lax.conv_general_dilated(a, w, (1, 1), "VALID",
                                     dimension_numbers=("NCHW", "OIHW", "NCHW"))
        return y + b[None, :, None, None]

    def pool(a):
        B, C, H, W = a.shape
        hp, wp = H // 2, W // 2
        a = a[:, :, :2 * hp, :2 * wp].reshape(B, C, hp, 2, wp, 2)
        return a.max(axis=(3, 5))

    x = pool(jnp.maximum(conv(x, params["conv1_w"], params["conv1_b"]), 0.0))
    x = pool(jnp.maximum(conv(x, params["conv2_w"], params["conv2_b"]), 0.0))
    x = x.reshape(x.shape[0], -1)
    h = jnp.maximum(x @ params["fc1_w"] + params["fc1_b"], 0.0)
    logits = h @ params["fc2_w"] + params["fc2_b"]
    return jax.nn.log_softmax(logits, axis=1)


# ----------------------- deterministic parameter init -------------------------
def init_params(key):
    ks = jax.random.split(key, 8)

    def u(k, shape, fan_in):
        bound = float(1.0 / (fan_in ** 0.5))
        return jax.random.uniform(k, shape, jnp.float32, -bound, bound)

    return {
        "conv1_w": u(ks[0], (NF1, 1, KSIZE, KSIZE), 1 * KSIZE * KSIZE),
        "conv1_b": u(ks[1], (NF1,), 1 * KSIZE * KSIZE),
        "conv2_w": u(ks[2], (NF2, NF1, KSIZE, KSIZE), NF1 * KSIZE * KSIZE),
        "conv2_b": u(ks[3], (NF2,), NF1 * KSIZE * KSIZE),
        # Stored as (in, out) so the kernel does x @ W (== PyTorch x @ weight.T).
        "fc1_w": u(ks[4], (CONV_OUT, NFC), CONV_OUT),
        "fc1_b": u(ks[5], (NFC,), CONV_OUT),
        "fc2_w": u(ks[6], (NFC, NCLASS), NFC),
        "fc2_b": u(ks[7], (NCLASS,), NFC),
    }


if __name__ == "__main__":
    key = jax.random.PRNGKey(0)
    pkey, xkey = jax.random.split(key)
    params = init_params(pkey)
    x = jax.random.normal(xkey, (32, 1, 28, 28), jnp.float32)   # MNIST-shaped batch

    out = mnist_convnet_forward(params, x)
    out = jax.block_until_ready(out)
    assert out.shape == (32, NCLASS) and out.dtype == jnp.float32

    ref = reference_forward(params, x)
    # bf16 MXU inputs -> use a combined abs/rel tolerance.
    err = float(jnp.max(jnp.abs(out - ref) / (1.0 + jnp.abs(ref))))
    assert err < 5e-2, f"mismatch vs reference: max rel err {err}"

    print("KERNEL_OK")
</pallas_src>

<mosaic_0001>
module attributes {stable_mosaic.version = 11 : i64} {
  func.func @_fused_forward_kernel(%arg0: i32, %arg1: memref<28x16x28xf32, #tpu.memory_space<vmem>>, %arg2: memref<688x128xbf16, #tpu.memory_space<vmem>>, %arg3: memref<4x128xf32, #tpu.memory_space<vmem>>, %arg4: memref<16x128xf32, #tpu.memory_space<vmem>>) attributes {dimension_semantics = [#tpu.dimension_semantics<parallel>], iteration_bounds = array<i64: 2>, scalar_prefetch = 0 : i64, scratch_operands = 0 : i64, tpu.core_type = #tpu.core_type<tc>, window_params = [{transform_indices = @transform_0, window_bounds = array<i64: 28, 16, 28>}, {pipeline_mode = #tpu.pipeline_mode<synchronous>, transform_indices = @transform_1, window_bounds = array<i64: 688, 128>}, {pipeline_mode = #tpu.pipeline_mode<synchronous>, transform_indices = @transform_2, window_bounds = array<i64: 4, 128>}, {transform_indices = @transform_3, window_bounds = array<i64: 16, 128>}]} {
    %c0 = arith.constant 0 : index
    %c0_0 = arith.constant 0 : index
    %c0_1 = arith.constant 0 : index
    %0 = vector.load %arg1[%c0, %c0_0, %c0_1] : memref<28x16x28xf32, #tpu.memory_space<vmem>>, vector<28x16x28xf32>
    %1 = vector.shape_cast %0 : vector<28x16x28xf32> to vector<448x28xf32>
    %2 = arith.truncf %1 : vector<448x28xf32> to vector<448x28xbf16>
    %3 = vector.extract_strided_slice %2 {offsets = [0, 0], sizes = [416, 28], strides = [1, 1]} : vector<448x28xbf16> to vector<416x28xbf16>
    %c0_2 = arith.constant 0 : index
    %c0_3 = arith.constant 0 : index
    %4 = vector.load %arg2[%c0_2, %c0_3] : memref<688x128xbf16, #tpu.memory_space<vmem>>, vector<28x104xbf16>
    %cst = arith.constant dense<0.000000e+00> : vector<416x104xf32>
    %5 = tpu.matmul %3, %4, %cst {dimension_numbers = #tpu.dot_dimension_numbers<[1], [0], [0], [1], [0, 0, 1, 1], [], []>} : vector<416x28xbf16>, vector<28x104xbf16>, vector<416x104xf32> -> vector<416x104xf32>
    %6 = vector.extract_strided_slice %2 {offsets = [16, 0], sizes = [416, 28], strides = [1, 1]} : vector<448x28xbf16> to vector<416x28xbf16>
    %c32 = arith.constant 32 : index
    %c0_4 = arith.constant 0 : index
    %7 = vector.load %arg2[%c32, %c0_4] : memref<688x128xbf16, #tpu.memory_space<vmem>>, vector<28x104xbf16>
    %cst_5 = arith.constant dense<0.000000e+00> : vector<416x104xf32>
    %8 = tpu.matmul %6, %7, %cst_5 {dimension_numbers = #tpu.dot_dimension_numbers<[1], [0], [0], [1], [0, 0, 1, 1], [], []>} : vector<416x28xbf16>, vector<28x104xbf16>, vector<416x104xf32> -> vector<416x104xf32>
    %9 = arith.addf %5, %8 : vector<416x104xf32>
    %10 = vector.extract_strided_slice %2 {offsets = [32, 0], sizes = [416, 28], strides = [1, 1]} : vector<448x28xbf16> to vector<416x28xbf16>
    %c64 = arith.constant 64 : index
    %c0_6 = arith.constant 0 : index
    %11 = vector.load %arg2[%c64, %c0_6] : memref<688x128xbf16, #tpu.memory_space<vmem>>, vector<28x104xbf16>
    %cst_7 = arith.constant dense<0.000000e+00> : vector<416x104xf32>
    %12 = tpu.matmul %10, %11, %cst_7 {dimension_numbers = #tpu.dot_dimension_numbers<[1], [0], [0], [1], [0, 0, 1, 1], [], []>} : vector<416x28xbf16>, vector<28x104xbf16>, vector<416x104xf32> -> vector<416x104xf32>
    %13 = arith.addf %9, %12 : vector<416x104xf32>
    %c0_8 = arith.constant 0 : index
    %c0_9 = arith.constant 0 : index
    %14 = vector.load %arg3[%c0_8, %c0_9] : memref<4x128xf32, #tpu.memory_space<vmem>>, vector<1x104xf32>
    %15 = vector.broadcast %14 : vector<1x104xf32> to vector<416x104xf32>
    %16 = arith.addf %13, %15 : vector<416x104xf32>
    %cst_10 = arith.constant 0.000000e+00 : f32
    %17 = vector.broadcast %cst_10 : f32 to vector<416x104xf32>
    %18 = arith.maximumf %16, %17 : vector<416x104xf32>
    %19 = vector.shape_cast %18 : vector<416x104xf32> to vector<13x32x104xf32>
    %20 = vector.extract_strided_slice %19 {offsets = [0, 0, 0], sizes = [13, 16, 104], strides = [1, 1, 1]} : vector<13x32x104xf32> to vector<13x16x104xf32>
    %21 = vector.extract_strided_slice %19 {offsets = [0, 16, 0], sizes = [13, 16, 104], strides = [1, 1, 1]} : vector<13x32x104xf32> to vector<13x16x104xf32>
    %22 = arith.maximumf %20, %21 : vector<13x16x104xf32>
    %23 = vector.shape_cast %22 : vector<13x16x104xf32> to vector<208x104xf32>
    %24 = arith.truncf %23 : vector<208x104xf32> to vector<208x104xbf16>
    %c264 = arith.constant 264 : index
    %c0_11 = arith.constant 0 : index
    %25 = vector.load %arg2[%c264, %c0_11] : memref<688x128xbf16, #tpu.memory_space<vmem>>, vector<104x104xbf16>
    %cst_12 = arith.constant dense<0.000000e+00> : vector<208x104xf32>
    %26 = tpu.matmul %24, %25, %cst_12 {dimension_numbers = #tpu.dot_dimension_numbers<[1], [0], [0], [1], [0, 0, 1, 1], [], []>} : vector<208x104xbf16>, vector<104x104xbf16>, vector<208x104xf32> -> vector<208x104xf32>
    %27 = vector.extract_strided_slice %26 {offsets = [0, 0], sizes = [208, 52], strides = [1, 1]} : vector<208x104xf32> to vector<208x52xf32>
    %28 = vector.extract_strided_slice %26 {offsets = [0, 52], sizes = [208, 52], strides = [1, 1]} : vector<208x104xf32> to vector<208x52xf32>
    %29 = arith.maximumf %27, %28 : vector<208x52xf32>
    %30 = arith.truncf %29 : vector<208x52xf32> to vector<208x52xbf16>
    %31 = vector.extract_strided_slice %30 {offsets = [0, 0], sizes = [176, 52], strides = [1, 1]} : vector<208x52xbf16> to vector<176x52xbf16>
    %c96 = arith.constant 96 : index
    %c0_13 = arith.constant 0 : index
    %32 = vector.load %arg2[%c96, %c0_13] : memref<688x128xbf16, #tpu.memory_space<vmem>>, vector<52x88xbf16>
    %cst_14 = arith.constant dense<0.000000e+00> : vector<176x88xf32>
    %33 = tpu.matmul %31, %32, %cst_14 {dimension_numbers = #tpu.dot_dimension_numbers<[1], [0], [0], [1], [0, 0, 1, 1], [], []>} : vector<176x52xbf16>, vector<52x88xbf16>, vector<176x88xf32> -> vector<176x88xf32>
    %34 = vector.extract_strided_slice %30 {offsets = [16, 0], sizes = [176, 52], strides = [1, 1]} : vector<208x52xbf16> to vector<176x52xbf16>
    %c152 = arith.constant 152 : index
    %c0_15 = arith.constant 0 : index
    %35 = vector.load %arg2[%c152, %c0_15] : memref<688x128xbf16, #tpu.memory_space<vmem>>, vector<52x88xbf16>
    %cst_16 = arith.constant dense<0.000000e+00> : vector<176x88xf32>
    %36 = tpu.matmul %34, %35, %cst_16 {dimension_numbers = #tpu.dot_dimension_numbers<[1], [0], [0], [1], [0, 0, 1, 1], [], []>} : vector<176x52xbf16>, vector<52x88xbf16>, vector<176x88xf32> -> vector<176x88xf32>
    %37 = arith.addf %33, %36 : vector<176x88xf32>
    %38 = vector.extract_strided_slice %30 {offsets = [32, 0], sizes = [176, 52], strides = [1, 1]} : vector<208x52xbf16> to vector<176x52xbf16>
    %c208 = arith.constant 208 : index
    %c0_17 = arith.constant 0 : index
    %39 = vector.load %arg2[%c208, %c0_17] : memref<688x128xbf16, #tpu.memory_space<vmem>>, vector<52x88xbf16>
    %cst_18 = arith.constant dense<0.000000e+00> : vector<176x88xf32>
    %40 = tpu.matmul %38, %39, %cst_18 {dimension_numbers = #tpu.dot_dimension_numbers<[1], [0], [0], [1], [0, 0, 1, 1], [], []>} : vector<176x52xbf16>, vector<52x88xbf16>, vector<176x88xf32> -> vector<176x88xf32>
    %41 = arith.addf %37, %40 : vector<176x88xf32>
    %c1 = arith.constant 1 : index
    %c0_19 = arith.constant 0 : index
    %42 = vector.load %arg3[%c1, %c0_19] : memref<4x128xf32, #tpu.memory_space<vmem>>, vector<1x88xf32>
    %43 = vector.broadcast %42 : vector<1x88xf32> to vector<176x88xf32>
    %44 = arith.addf %41, %43 : vector<176x88xf32>
    %cst_20 = arith.constant 0.000000e+00 : f32
    %45 = vector.broadcast %cst_20 : f32 to vector<176x88xf32>
    %46 = arith.maximumf %44, %45 : vector<176x88xf32>
    %47 = vector.extract_strided_slice %46 {offsets = [0, 0], sizes = [160, 88], strides = [1, 1]} : vector<176x88xf32> to vector<160x88xf32>
    %48 = vector.shape_cast %47 : vector<160x88xf32> to vector<5x32x88xf32>
    %49 = vector.extract_strided_slice %48 {offsets = [0, 0, 0], sizes = [5, 16, 88], strides = [1, 1, 1]} : vector<5x32x88xf32> to vector<5x16x88xf32>
    %50 = vector.extract_strided_slice %48 {offsets = [0, 16, 0], sizes = [5, 16, 88], strides = [1, 1, 1]} : vector<5x32x88xf32> to vector<5x16x88xf32>
    %51 = arith.maximumf %49, %50 : vector<5x16x88xf32>
    %52 = vector.shape_cast %51 : vector<5x16x88xf32> to vector<80x88xf32>
    %53 = arith.truncf %52 : vector<80x88xf32> to vector<80x88xbf16>
    %c368 = arith.constant 368 : index
    %c0_21 = arith.constant 0 : index
    %54 = vector.load %arg2[%c368, %c0_21] : memref<688x128xbf16, #tpu.memory_space<vmem>>, vector<88x80xbf16>
    %cst_22 = arith.constant dense<0.000000e+00> : vector<80x80xf32>
    %55 = tpu.matmul %53, %54, %cst_22 {dimension_numbers = #tpu.dot_dimension_numbers<[1], [0], [0], [1], [0, 0, 1, 1], [], []>} : vector<80x88xbf16>, vector<88x80xbf16>, vector<80x80xf32> -> vector<80x80xf32>
    %56 = vector.extract_strided_slice %55 {offsets = [0, 0], sizes = [80, 40], strides = [1, 1]} : vector<80x80xf32> to vector<80x40xf32>
    %57 = vector.extract_strided_slice %55 {offsets = [0, 40], sizes = [80, 40], strides = [1, 1]} : vector<80x80xf32> to vector<80x40xf32>
    %58 = arith.maximumf %56, %57 : vector<80x40xf32>
    %59 = arith.truncf %58 : vector<80x40xf32> to vector<80x40xbf16>
    %60 = vector.extract_strided_slice %59 {offsets = [0, 0], sizes = [16, 40], strides = [1, 1]} : vector<80x40xbf16> to vector<16x40xbf16>
    %c456 = arith.constant 456 : index
    %c0_23 = arith.constant 0 : index
    %61 = vector.load %arg2[%c456, %c0_23] : memref<688x128xbf16, #tpu.memory_space<vmem>>, vector<40x32xbf16>
    %cst_24 = arith.constant dense<0.000000e+00> : vector<16x32xf32>
    %62 = tpu.matmul %60, %61, %cst_24 {dimension_numbers = #tpu.dot_dimension_numbers<[1], [0], [0], [1], [0, 0, 1, 1], [], []>} : vector<16x40xbf16>, vector<40x32xbf16>, vector<16x32xf32> -> vector<16x32xf32>
    %63 = vector.extract_strided_slice %59 {offsets = [16, 0], sizes = [16, 40], strides = [1, 1]} : vector<80x40xbf16> to vector<16x40xbf16>
    %c496 = arith.constant 496 : index
    %c0_25 = arith.constant 0 : index
    %64 = vector.load %arg2[%c496, %c0_25] : memref<688x128xbf16, #tpu.memory_space<vmem>>, vector<40x32xbf16>
    %cst_26 = arith.constant dense<0.000000e+00> : vector<16x32xf32>
    %65 = tpu.matmul %63, %64, %cst_26 {dimension_numbers = #tpu.dot_dimension_numbers<[1], [0], [0], [1], [0, 0, 1, 1], [], []>} : vector<16x40xbf16>, vector<40x32xbf16>, vector<16x32xf32> -> vector<16x32xf32>
    %66 = arith.addf %62, %65 : vector<16x32xf32>
    %67 = vector.extract_strided_slice %59 {offsets = [32, 0], sizes = [16, 40], strides = [1, 1]} : vector<80x40xbf16> to vector<16x40xbf16>
    %c536 = arith.constant 536 : index
    %c0_27 = arith.constant 0 : index
    %68 = vector.load %arg2[%c536, %c0_27] : memref<688x128xbf16, #tpu.memory_space<vmem>>, vector<40x32xbf16>
    %cst_28 = arith.constant dense<0.000000e+00> : vector<16x32xf32>
    %69 = tpu.matmul %67, %68, %cst_28 {dimension_numbers = #tpu.dot_dimension_numbers<[1], [0], [0], [1], [0, 0, 1, 1], [], []>} : vector<16x40xbf16>, vector<40x32xbf16>, vector<16x32xf32> -> vector<16x32xf32>
    %70 = arith.addf %66, %69 : vector<16x32xf32>
    %71 = vector.extract_strided_slice %59 {offsets = [48, 0], sizes = [16, 40], strides = [1, 1]} : vector<80x40xbf16> to vector<16x40xbf16>
    %c576 = arith.constant 576 : index
    %c0_29 = arith.constant 0 : index
    %72 = vector.load %arg2[%c576, %c0_29] : memref<688x128xbf16, #tpu.memory_space<vmem>>, vector<40x32xbf16>
    %cst_30 = arith.constant dense<0.000000e+00> : vector<16x32xf32>
    %73 = tpu.matmul %71, %72, %cst_30 {dimension_numbers = #tpu.dot_dimension_numbers<[1], [0], [0], [1], [0, 0, 1, 1], [], []>} : vector<16x40xbf16>, vector<40x32xbf16>, vector<16x32xf32> -> vector<16x32xf32>
    %74 = arith.addf %70, %73 : vector<16x32xf32>
    %75 = vector.extract_strided_slice %59 {offsets = [64, 0], sizes = [16, 40], strides = [1, 1]} : vector<80x40xbf16> to vector<16x40xbf16>
    %c616 = arith.constant 616 : index
    %c0_31 = arith.constant 0 : index
    %76 = vector.load %arg2[%c616, %c0_31] : memref<688x128xbf16, #tpu.memory_space<vmem>>, vector<40x32xbf16>
    %cst_32 = arith.constant dense<0.000000e+00> : vector<16x32xf32>
    %77 = tpu.matmul %75, %76, %cst_32 {dimension_numbers = #tpu.dot_dimension_numbers<[1], [0], [0], [1], [0, 0, 1, 1], [], []>} : vector<16x40xbf16>, vector<40x32xbf16>, vector<16x32xf32> -> vector<16x32xf32>
    %78 = arith.addf %74, %77 : vector<16x32xf32>
    %c2 = arith.constant 2 : index
    %c0_33 = arith.constant 0 : index
    %79 = vector.load %arg3[%c2, %c0_33] : memref<4x128xf32, #tpu.memory_space<vmem>>, vector<1x32xf32>
    %80 = vector.broadcast %79 : vector<1x32xf32> to vector<16x32xf32>
    %81 = arith.addf %78, %80 : vector<16x32xf32>
    %cst_34 = arith.constant 0.000000e+00 : f32
    %82 = vector.broadcast %cst_34 : f32 to vector<16x32xf32>
    %83 = arith.maximumf %81, %82 : vector<16x32xf32>
    %84 = arith.truncf %83 : vector<16x32xf32> to vector<16x32xbf16>
    %c656 = arith.constant 656 : index
    %c0_35 = arith.constant 0 : index
    %85 = vector.load %arg2[%c656, %c0_35] : memref<688x128xbf16, #tpu.memory_space<vmem>>, vector<32x128xbf16>
    %cst_36 = arith.constant dense<0.000000e+00> : vector<16x128xf32>
    %86 = tpu.matmul %84, %85, %cst_36 {dimension_numbers = #tpu.dot_dimension_numbers<[1], [0], [0], [1], [0, 0, 1, 1], [], []>} : vector<16x32xbf16>, vector<32x128xbf16>, vector<16x128xf32> -> vector<16x128xf32>
    %c3 = arith.constant 3 : index
    %c0_37 = arith.constant 0 : index
    %87 = vector.load %arg3[%c3, %c0_37] : memref<4x128xf32, #tpu.memory_space<vmem>>, vector<1x128xf32>
    %88 = vector.broadcast %87 : vector<1x128xf32> to vector<16x128xf32>
    %89 = arith.addf %86, %88 : vector<16x128xf32>
    %cst_38 = arith.constant dense<0xFF800000> : vector<16xf32>
    %90 = vector.multi_reduction <maximumf>, %89, %cst_38 [1] : vector<16x128xf32> to vector<16xf32>
    %91 = vector.shape_cast %90 : vector<16xf32> to vector<16x1xf32>
    %92 = vector.broadcast %91 : vector<16x1xf32> to vector<16x128xf32>
    %93 = arith.subf %89, %92 : vector<16x128xf32>
    %94 = math.exp %93 : vector<16x128xf32>
    %cst_39 = arith.constant dense<0.000000e+00> : vector<16xf32>
    %95 = vector.multi_reduction <add>, %94, %cst_39 [1] : vector<16x128xf32> to vector<16xf32>
    %96 = vector.shape_cast %95 : vector<16xf32> to vector<16x1xf32>
    %97 = math.log %96 : vector<16x1xf32>
    %98 = vector.broadcast %97 : vector<16x1xf32> to vector<16x128xf32>
    %99 = arith.subf %93, %98 : vector<16x128xf32>
    %c0_40 = arith.constant 0 : index
    %c0_41 = arith.constant 0 : index
    %100 = vector.load %arg4[%c0_40, %c0_41] : memref<16x128xf32, #tpu.memory_space<vmem>>, vector<16x128xf32>
    tpu.vector_store %arg4[%c0_40, %c0_41], %99 {strides = array<i32>} : memref<16x128xf32, #tpu.memory_space<vmem>>, vector<16x128xf32>,
    return
  }
  func.func @transform_0(%arg0: i32) -> (i32, i32, i32) {
    %c0_i32 = arith.constant 0 : i32
    %c0_i32_0 = arith.constant 0 : i32
    %c0_i32_1 = arith.constant 0 : i32
    return %c0_i32, %arg0, %c0_i32_0 : i32, i32, i32
  }
  func.func @transform_1(%arg0: i32) -> (i32, i32) {
    %c0_i32 = arith.constant 0 : i32
    %c0_i32_0 = arith.constant 0 : i32
    %c0_i32_1 = arith.constant 0 : i32
    return %c0_i32, %c0_i32_0 : i32, i32
  }
  func.func @transform_2(%arg0: i32) -> (i32, i32) {
    %c0_i32 = arith.constant 0 : i32
    %c0_i32_0 = arith.constant 0 : i32
    %c0_i32_1 = arith.constant 0 : i32
    return %c0_i32, %c0_i32_0 : i32, i32
  }
  func.func @transform_3(%arg0: i32) -> (i32, i32) {
    %c0_i32 = arith.constant 0 : i32
    %c0_i32_0 = arith.constant 0 : i32
    return %arg0, %c0_i32 : i32, i32
  }
}

</mosaic_0001>

<llo_original>
// kernel: tpu_custom_call.1
$region0: #{tpu_custom_call.1}
  #allocation0 [shape = 'u32[]', space=smem, size = 0x4, offset = 0x4, fixed_abs, tag = 'smem constant byte address 0x4 - core index']
  #allocation1 [shape = 'u32[72,128]{1,0:T(1,128)}', space=vmem, size = 0x9000, scoped, tag = 'internal scratch']
  #allocation9 [shape = 's32[]', space=sflag, size = 0x4, offset = 0, fixed_abs, tag = 'sflag constant byte address 0x0 - dummy sync flag']
  %s0 = inlined_call_operand.hbm [shape: f32[28,32,28], index: 0, kind: input, shape index: {}]
  %s1 = inlined_call_operand.hbm [shape: bf16[688,128], index: 1, kind: input, shape index: {}]
  %s2 = inlined_call_operand.hbm [shape: f32[4,128], index: 2, kind: input, shape index: {}]
  %s3 = inlined_call_operand.hbm [shape: f32[32,128], index: 3, kind: output, shape index: {}]
  %s4 = sld [smem:[#allocation0]]
  $region57: #{tpu_custom_call.1} parent=0
    _
  %s6 = ssub.s32 1, %s4
  %s7 = scalar_select 0, %s6, %s4
  $region1: #{tpu_custom_call.1} parent=0
    #allocation2 [shape = 'u8[458752]{0}', space=vmem, size = 0x70000, scoped, tag = 'input window, operand 0']
    #allocation3 [shape = 's32[2]{0}', space=sflag, size = 0x8, scoped, tag = 'scoped memory for tpu_custom_call.1']
    #allocation4 [shape = 's32[2]{0}', space=sflag, size = 0x8, scoped, tag = 'scoped memory for tpu_custom_call.1']
    #allocation5 [shape = 'u8[176128]{0}', space=vmem, size = 0x2b000, scoped, tag = 'input window, operand 1, single buffered']
    #allocation6 [shape = 's32[1]{0}', space=sflag, size = 0x4, scoped, tag = 'scoped memory for tpu_custom_call.1']
    #allocation7 [shape = 'u8[2048]{0}', space=vmem, size = 0x800, scoped, tag = 'input window, operand 2, single buffered']
    #allocation8 [shape = 'u8[16384]{0}', space=vmem, size = 0x4000, scoped, tag = 'output window, operand 0']
    %8 = vsyncpa [#allocation3], 0
    %s9 = scalar_lea.sflag [#allocation3], 1
    %10 = vsyncpa %s9, 0
    %11 = vsyncpa [#allocation6], 0
    %12 = vsyncpa [#allocation4], 0
    %s13 = scalar_lea.sflag [#allocation4], 1
    %14 = vsyncpa %s13, 0
    loop: start=0, step=1, limit=4
    $region2: #{tpu_custom_call.1} parent=1 // loop_pre_header
      _
    $region3: #{tpu_custom_call.1} parent=1 // loop_header
      %s16 = sphi 0, %s20
      %p17 = scmp.ge.s32.totalorder %s16, 4
      %s26 = sphi 0, %s28
      %s29 = sphi 0, %s26
      %s30 = sphi 0, %s29
      %s46 = sphi 0, %s30
      %s50 = sphi 0, %s50
      %s52 = sphi 0, %s50
      %s53 = sphi 0, %s52
      %s67 = sphi 0, %s53
      %s71 = sphi 0, %s71
      %s73 = sphi 0, %s71
      %s74 = sphi 0, %s73
      %s88 = sphi 0, %s74
      %s94 = sphi 0, %s96
      %s97 = sphi 0, %s94
      %s98 = sphi 0, %s97
      %s114 = sphi 0, %s98
    $region4: #{tpu_custom_call.1} parent=1 // loop_header_branch
      %19 = sbr.rel (%p17) target = $region8
    $region5: #{tpu_custom_call.1} parent=1 // loop_body
      %s21 = ssub.s32 %s16, 1
      %s22 = ssub.s32 %s16, 2
      %s23 = sadd.s32 %s16, 1
      %s24 = ssub.s32 %s16, %s23
      %p25 = scmp.eq.s32.totalorder %s24, 0
      %s27 = sadd.s32 %s26, 1
      %s28 = scalar_select %p25, %s26, %s27
      %p31 = pneg %p25
      %p32 = scmp.eq.s32.totalorder %s16, 1
      %p33 = por %p31, %p32
      %p34 = scmp.ne.s32.totalorder %s26, %s29
      %p35 = scmp.eq.s32.totalorder %s16, 0
      %p36 = por %p34, %p35
      %p37 = scmp.ne.s32.totalorder %s26, %s29
      %p38 = scmp.eq.s32.totalorder %s21, 1
      %p39 = por %p37, %p38
      %p40 = scmp.ne.s32.totalorder %s29, %s30
      %p41 = scmp.eq.s32.totalorder %s21, 0
      %p42 = por %p40, %p41
      %p43 = scmp.ne.s32.totalorder %s29, %s30
      %p44 = scmp.eq.s32.totalorder %s22, 1
      %p45 = por %p43, %p44
      %p47 = scmp.ne.s32.totalorder %s30, %s46
      %p48 = scmp.eq.s32.totalorder %s22, 0
      %p49 = por %p47, %p48
      %s51 = sadd.s32 %s50, 1
      %p54 = scmp.eq.s32.totalorder %s16, 1
      %p55 = scmp.ne.s32.totalorder %s50, %s52
      %p56 = scmp.eq.s32.totalorder %s16, 0
      %p57 = por %p55, %p56
      %p58 = scmp.ne.s32.totalorder %s50, %s52
      %p59 = scmp.eq.s32.totalorder %s21, 1
      %p60 = por %p58, %p59
      %p61 = scmp.ne.s32.totalorder %s52, %s53
      %p62 = scmp.eq.s32.totalorder %s21, 0
      %p63 = por %p61, %p62
      %p64 = scmp.ne.s32.totalorder %s52, %s53
      %p65 = scmp.eq.s32.totalorder %s22, 1
      %p66 = por %p64, %p65
      %p68 = scmp.ne.s32.totalorder %s53, %s67
      %p69 = scmp.eq.s32.totalorder %s22, 0
      %p70 = por %p68, %p69
      %s72 = sadd.s32 %s71, 1
      %p75 = scmp.eq.s32.totalorder %s16, 1
      %p76 = scmp.ne.s32.totalorder %s71, %s73
      %p77 = scmp.eq.s32.totalorder %s16, 0
      %p78 = por %p76, %p77
      %p79 = scmp.ne.s32.totalorder %s71, %s73
      %p80 = scmp.eq.s32.totalorder %s21, 1
      %p81 = por %p79, %p80
      %p82 = scmp.ne.s32.totalorder %s73, %s74
      %p83 = scmp.eq.s32.totalorder %s21, 0
      %p84 = por %p82, %p83
      %p85 = scmp.ne.s32.totalorder %s73, %s74
      %p86 = scmp.eq.s32.totalorder %s22, 1
      %p87 = por %p85, %p86
      %p89 = scmp.ne.s32.totalorder %s74, %s88
      %p90 = scmp.eq.s32.totalorder %s22, 0
      %p91 = por %p89, %p90
      %s92 = ssub.s32 %s16, %s23
      %p93 = scmp.eq.s32.totalorder %s92, 0
      %s95 = sadd.s32 %s94, 1
      %s96 = scalar_select %p93, %s94, %s95
      %p99 = pneg %p93
      %p100 = scmp.eq.s32.totalorder %s16, 1
      %p101 = por %p99, %p100
      %p102 = scmp.ne.s32.totalorder %s94, %s97
      %p103 = scmp.eq.s32.totalorder %s16, 0
      %p104 = por %p102, %p103
      %p105 = scmp.ne.s32.totalorder %s94, %s97
      %p106 = scmp.eq.s32.totalorder %s21, 1
      %p107 = por %p105, %p106
      %p108 = scmp.ne.s32.totalorder %s97, %s98
      %p109 = scmp.eq.s32.totalorder %s21, 0
      %p110 = por %p108, %p109
      %p111 = scmp.ne.s32.totalorder %s97, %s98
      %p112 = scmp.eq.s32.totalorder %s22, 1
      %p113 = por %p111, %p112
      %p115 = scmp.ne.s32.totalorder %s98, %s114
      %p116 = scmp.eq.s32.totalorder %s22, 0
      %p117 = por %p115, %p116
      %p118 = scmp.le.s32.totalorder 1, %s16
      %p119 = scmp.lt.s32.totalorder %s16, 3
      %p120 = pnand %p118, %p119
      %p121 = pneg %p120
      // Predicated region
      $region9: #{tpu_custom_call.1} parent=5 // pred_check
        _
      $region10: #{tpu_custom_call.1} parent=5 // pred_check_branch
        %123 = sbr.rel (%p120) target = $region12
      $region11: #{tpu_custom_call.1} parent=5 // pred_region
        %s124 = ssub.s32 %s16, 1
        // Predicated region
        $region13: #{tpu_custom_call.1} parent=11 // pred_check
          %p125 = pneg %p63
        $region14: #{tpu_custom_call.1} parent=11 // pred_check_branch
          %127 = sbr.rel (%p125) target = $region16
        $region15: #{tpu_custom_call.1} parent=11 // pred_region
          %129 = vsyncadd [#allocation6], 0
          %s130 = sshll.u32 %s1, 4
          %s131 = int_to_ptr.hbm [resolvable:$true] %s130
          %s132 = sshll.u32 [#allocation5], 4
          %s133 = int_to_ptr.vmem [resolvable:$true] %s132
          %138 = dma.hbm_to_vmem [thread:$0]  %s131, 5504, %s133, [#allocation6], 64, 64, 4
        $region16: #{tpu_custom_call.1} parent=11 // pred_fallthru
          _
        // Predicated region
        $region17: #{tpu_custom_call.1} parent=11 // pred_check
          %p139 = pneg %p84
        $region18: #{tpu_custom_call.1} parent=11 // pred_check_branch
          %141 = sbr.rel (%p139) target = $region20
        $region19: #{tpu_custom_call.1} parent=11 // pred_region
          %143 = vsyncadd [#allocation6], 0
          %s145 = sshll.u32 %s2, 4
          %s146 = int_to_ptr.hbm [resolvable:$true] %s145
          %s147 = sshll.u32 [#allocation7], 4
          %s148 = int_to_ptr.vmem [resolvable:$true] %s147
          %150 = dma.hbm_to_vmem [thread:$0]  %s146, 64, %s148, [#allocation6]
        $region20: #{tpu_custom_call.1} parent=11 // pred_fallthru
          _
      $region12: #{tpu_custom_call.1} parent=5 // pred_fallthru
        _
      %p151 = scmp.lt.s32.totalorder %s16, 2
      // Predicated region
      $region21: #{tpu_custom_call.1} parent=5 // pred_check
        %p152 = pneg %p151
      $region22: #{tpu_custom_call.1} parent=5 // pred_check_branch
        %154 = sbr.rel (%p152) target = $region24
      $region23: #{tpu_custom_call.1} parent=5 // pred_region
        // Predicated region
        $region25: #{tpu_custom_call.1} parent=23 // pred_check
          %p155 = pneg %p36
        $region26: #{tpu_custom_call.1} parent=23 // pred_check_branch
          %157 = sbr.rel (%p155) target = $region28
        $region27: #{tpu_custom_call.1} parent=23 // pred_region
          #allocation10 [shape = 'u32[6]{0}', space=smem, size = 0x18, scoped, tag = 'DMA stride descriptor']
          %s158 = sand.u32 %s26, 1
          %s159 = scalar_lea.sflag [#allocation3], %s158
          %s160 = sand.u32 %s26, 1
          %s161 = smul.addr %s160, 448
          %s162 = scalar_lea.vmem [#allocation2], %s161
          %s163 = smul.u32 2, %s16
          %165 = vsyncadd %s159, 0
          %s166 = smul.addr %s163, 8
          %s167 = scalar_lea.hbm %s0, %s166
          %s169 = sshll.u32 1, 14
          %s170 = sxor.u32 4294967295, %s169
          %s172 = sld [smem:[#allocation0]]
          %s173 = sadd.s32 2, %s172
          %s175 = sshll.u32 7, 26
          %s176 = sxor.u32 4294967295, %s175
          %s177 = sand.u32 0, %s176
          %s178 = sshll.u32 %s173, 26
          %s179 = sor.u32 %s177, %s178
          %s180 = sshll.u32 %s167, 4
          %s181 = int_to_ptr.hbm [resolvable:$true] %s180
          %s182 = sshll.u32 %s162, 4
          %s183 = int_to_ptr.vmem [resolvable:$true] %s182
          %189 = sst [smem:[#allocation10]] 512
          %s190 = scalar_lea.smem [#allocation10], 1
          %191 = sst [smem:[%s190]] 256
          %s192 = scalar_lea.smem [#allocation10], 2
          %193 = sst [smem:[%s192]] 2
          %s194 = scalar_lea.smem [#allocation10], 3
          %195 = sst [smem:[%s194]] 128
          %s196 = scalar_lea.smem [#allocation10], 4
          %197 = sst [smem:[%s196]] 128
          %s198 = scalar_lea.smem [#allocation10], 5
          %199 = sst [smem:[%s198]] 8
          %201 = dma.general %s181, 7168, %s183, %s159, [#allocation9], [#allocation10], %s179, 0
        $region28: #{tpu_custom_call.1} parent=23 // pred_fallthru
          _
      $region24: #{tpu_custom_call.1} parent=5 // pred_fallthru
        _
      %p202 = scmp.le.s32.totalorder 1, %s16
      %p203 = scmp.lt.s32.totalorder %s16, 3
      %p204 = pnand %p202, %p203
      %p205 = pneg %p204
      // Predicated region
      $region29: #{tpu_custom_call.1} parent=5 // pred_check
        _
      $region30: #{tpu_custom_call.1} parent=5 // pred_check_branch
        %207 = sbr.rel (%p204) target = $region32
      $region31: #{tpu_custom_call.1} parent=5 // pred_region
        %s208 = ssub.s32 %s16, 1
        %s209 = sand.u32 %s29, 1
        %s210 = scalar_lea.sflag [#allocation3], %s209
        %s211 = sand.u32 %s29, 1
        %s212 = smul.addr %s211, 448
        %s213 = scalar_lea.vmem [#allocation2], %s212
        // Predicated region
        $region33: #{tpu_custom_call.1} parent=31 // pred_check
          %p214 = pneg %p42
        $region34: #{tpu_custom_call.1} parent=31 // pred_check_branch
          %216 = sbr.rel (%p214) target = $region36
        $region35: #{tpu_custom_call.1} parent=31 // pred_region
          %218 = dma.done %s210, 7168
        $region36: #{tpu_custom_call.1} parent=31 // pred_fallthru
          _
        // Predicated region
        $region37: #{tpu_custom_call.1} parent=31 // pred_check
          %p219 = pneg %p63
        $region38: #{tpu_custom_call.1} parent=31 // pred_check_branch
          %221 = sbr.rel (%p219) target = $region40
        $region39: #{tpu_custom_call.1} parent=31 // pred_region
          %223 = dma.done [#allocation6], 5504
        $region40: #{tpu_custom_call.1} parent=31 // pred_fallthru
          _
        // Predicated region
        $region41: #{tpu_custom_call.1} parent=31 // pred_check
          %p224 = pneg %p84
        $region42: #{tpu_custom_call.1} parent=31 // pred_check_branch
          %226 = sbr.rel (%p224) target = $region44
        $region43: #{tpu_custom_call.1} parent=31 // pred_region
          %228 = dma.done [#allocation6], 64
        $region44: #{tpu_custom_call.1} parent=31 // pred_fallthru
          _
        %s229 = sand.u32 %s29, 1
        %s230 = scalar_lea.sflag [#allocation3], %s229
        %s231 = sand.u32 %s29, 1
        %s232 = smul.addr %s231, 448
        %s233 = scalar_lea.vmem [#allocation2], %s232
        %p234 = pneg %p42
        %p235 = pneg %p39
        %p236 = pneg %p63
        %p237 = pneg %p60
        %p238 = pneg %p84
        %p239 = pneg %p81
        %p240 = pneg %p110
        %p241 = pneg %p107
        %s242 = sand.u32 %s97, 1
        %s243 = scalar_lea.sflag [#allocation4], %s242
        %s244 = sand.u32 %s97, 1
        %s245 = smul.addr %s244, 16
        %s246 = scalar_lea.vmem [#allocation8], %s245
        %s247 = smul.u32 2, %s21
        %s248 = smul.u32 2, %s21
        %v250 = vld [vmem:[%s213] sm:$0xff]
        %v251 = vld [vmem:[%s213 + $0x8] sm:$0xff]
        %v252 = vld [vmem:[%s213 + $0x10] sm:$0xff]
        %v253 = vld [vmem:[%s213 + $0x18] sm:$0xff]
        %v254 = vld [vmem:[%s213 + $0x20] sm:$0xff]
        %v255 = vld [vmem:[%s213 + $0x28] sm:$0xff]
        %v256 = vld [vmem:[%s213 + $0x30] sm:$0xff]
        %v257 = vld [vmem:[%s213 + $0x38] sm:$0xff]
        %v258 = vld [vmem:[%s213 + $0x40] sm:$0xff]
        %v259 = vld [vmem:[%s213 + $0x48] sm:$0xff]
        %v260 = vld [vmem:[%s213 + $0x50] sm:$0xff]
        %v261 = vld [vmem:[%s213 + $0x58] sm:$0xff]
        %v262 = vld [vmem:[%s213 + $0x60] sm:$0xff]
        %v263 = vld [vmem:[%s213 + $0x68] sm:$0xff]
        %v264 = vld [vmem:[%s213 + $0x70] sm:$0xff]
        %v265 = vld [vmem:[%s213 + $0x78] sm:$0xff]
        %v266 = vld [vmem:[%s213 + $0x80] sm:$0xff]
        %v267 = vld [vmem:[%s213 + $0x88] sm:$0xff]
        %v268 = vld [vmem:[%s213 + $0x90] sm:$0xff]
        %v269 = vld [vmem:[%s213 + $0x98] sm:$0xff]
        %v270 = vld [vmem:[%s213 + $0xa0] sm:$0xff]
        %v271 = vld [vmem:[%s213 + $0xa8] sm:$0xff]
        %v272 = vld [vmem:[%s213 + $0xb0] sm:$0xff]
        %v273 = vld [vmem:[%s213 + $0xb8] sm:$0xff]
        %v274 = vld [vmem:[%s213 + $0xc0] sm:$0xff]
        %v275 = vld [vmem:[%s213 + $0xc8] sm:$0xff]
        %v276 = vld [vmem:[%s213 + $0xd0] sm:$0xff]
        %v277 = vld [vmem:[%s213 + $0xd8] sm:$0xff]
        %v278 = vld [vmem:[%s213 + $0xe0] sm:$0xff]
        %v279 = vld [vmem:[%s213 + $0xe8] sm:$0xff]
        %v280 = vld [vmem:[%s213 + $0xf0] sm:$0xff]
        %v281 = vld [vmem:[%s213 + $0xf8] sm:$0xff]
        %v282 = vld [vmem:[%s213 + $0x100] sm:$0xff]
        %v283 = vld [vmem:[%s213 + $0x108] sm:$0xff]
        %v284 = vld [vmem:[%s213 + $0x110] sm:$0xff]
        %v285 = vld [vmem:[%s213 + $0x118] sm:$0xff]
        %v286 = vld [vmem:[%s213 + $0x120] sm:$0xff]
        %v287 = vld [vmem:[%s213 + $0x128] sm:$0xff]
        %v288 = vld [vmem:[%s213 + $0x130] sm:$0xff]
        %v289 = vld [vmem:[%s213 + $0x138] sm:$0xff]
        %v290 = vld [vmem:[%s213 + $0x140] sm:$0xff]
        %v291 = vld [vmem:[%s213 + $0x148] sm:$0xff]
        %v292 = vld [vmem:[%s213 + $0x150] sm:$0xff]
        %v293 = vld [vmem:[%s213 + $0x158] sm:$0xff]
        %v294 = vld [vmem:[%s213 + $0x160] sm:$0xff]
        %v295 = vld [vmem:[%s213 + $0x168] sm:$0xff]
        %v296 = vld [vmem:[%s213 + $0x170] sm:$0xff]
        %v297 = vld [vmem:[%s213 + $0x178] sm:$0xff]
        %v298 = vld [vmem:[%s213 + $0x180] sm:$0xff]
        %v299 = vld [vmem:[%s213 + $0x188] sm:$0xff]
        %v300 = vld [vmem:[%s213 + $0x190] sm:$0xff]
        %v301 = vld [vmem:[%s213 + $0x198] sm:$0xff]
        %v302 = vld [vmem:[%s213 + $0x1a0] sm:$0xff]
        %v303 = vld [vmem:[%s213 + $0x1a8] sm:$0xff]
        %v304 = vld [vmem:[%s213 + $0x1b0] sm:$0xff]
        %v305 = vld [vmem:[%s213 + $0x1b8] sm:$0xff]
        %v306 = vpack.c.bf16 %v250, %v250
        %v307 = vpack.c.bf16 %v251, %v251
        %v308 = vpack.c.bf16 %v252, %v252
        %v309 = vpack.c.bf16 %v253, %v253
        %v310 = vpack.c.bf16 %v254, %v254
        %v311 = vpack.c.bf16 %v255, %v255
        %v312 = vpack.c.bf16 %v256, %v256
        %v313 = vpack.c.bf16 %v257, %v257
        %v314 = vpack.c.bf16 %v258, %v258
        %v315 = vpack.c.bf16 %v259, %v259
        %v316 = vpack.c.bf16 %v260, %v260
        %v317 = vpack.c.bf16 %v261, %v261
        %v318 = vpack.c.bf16 %v262, %v262
        %v319 = vpack.c.bf16 %v263, %v263
        %v320 = vpack.c.bf16 %v264, %v264
        %v321 = vpack.c.bf16 %v265, %v265
        %v322 = vpack.c.bf16 %v266, %v266
        %v323 = vpack.c.bf16 %v267, %v267
        %v324 = vpack.c.bf16 %v268, %v268
        %v325 = vpack.c.bf16 %v269, %v269
        %v326 = vpack.c.bf16 %v270, %v270
        %v327 = vpack.c.bf16 %v271, %v271
        %v328 = vpack.c.bf16 %v272, %v272
        %v329 = vpack.c.bf16 %v273, %v273
        %v330 = vpack.c.bf16 %v274, %v274
        %v331 = vpack.c.bf16 %v275, %v275
        %v332 = vpack.c.bf16 %v276, %v276
        %v333 = vpack.c.bf16 %v277, %v277
        %v334 = vpack.c.bf16 %v278, %v278
        %v335 = vpack.c.bf16 %v279, %v279
        %v336 = vpack.c.bf16 %v280, %v280
        %v337 = vpack.c.bf16 %v281, %v281
        %v338 = vpack.c.bf16 %v282, %v282
        %v339 = vpack.c.bf16 %v283, %v283
        %v340 = vpack.c.bf16 %v284, %v284
        %v341 = vpack.c.bf16 %v285, %v285
        %v342 = vpack.c.bf16 %v286, %v286
        %v343 = vpack.c.bf16 %v287, %v287
        %v344 = vpack.c.bf16 %v288, %v288
        %v345 = vpack.c.bf16 %v289, %v289
        %v346 = vpack.c.bf16 %v290, %v290
        %v347 = vpack.c.bf16 %v291, %v291
        %v348 = vpack.c.bf16 %v292, %v292
        %v349 = vpack.c.bf16 %v293, %v293
        %v350 = vpack.c.bf16 %v294, %v294
        %v351 = vpack.c.bf16 %v295, %v295
        %v352 = vpack.c.bf16 %v296, %v296
        %v353 = vpack.c.bf16 %v297, %v297
        %v354 = vpack.c.bf16 %v298, %v298
        %v355 = vpack.c.bf16 %v299, %v299
        %v356 = vpack.c.bf16 %v300, %v300
        %v357 = vpack.c.bf16 %v301, %v301
        %v358 = vpack.c.bf16 %v302, %v302
        %v359 = vpack.c.bf16 %v303, %v303
        %v360 = vpack.c.bf16 %v304, %v304
        %v361 = vpack.c.bf16 %v305, %v305
        %v362 = vld [vmem:[#allocation5] sm:$0xf]
        %v363 = vld [vmem:[#allocation5 + $0x4] sm:$0xf]
        %v364 = vld [vmem:[#allocation5 + $0x8] sm:$0xf]
        %v365 = vld [vmem:[#allocation5 + $0xc] sm:$0x3]
        %v366 = vld [vmem:[#allocation5 + $0x10] sm:$0xf]
        %v367 = vld [vmem:[#allocation5 + $0x14] sm:$0xf]
        %v368 = vld [vmem:[#allocation5 + $0x18] sm:$0xf]
        %v369 = vld [vmem:[#allocation5 + $0x1c] sm:$0x3]
        %v422 = vunpack.c.l.b16 %v308
        %v423 = vunpack.c.l.b16 %v309
        %v424 = vunpack.c.l.b16 %v310
        %v425 = vunpack.c.l.b16 %v311
        %v426 = vunpack.c.l.b16 %v312
        %v427 = vunpack.c.l.b16 %v313
        %v428 = vunpack.c.l.b16 %v314
        %v429 = vunpack.c.l.b16 %v315
        %v430 = vunpack.c.l.b16 %v316
        %v431 = vunpack.c.l.b16 %v317
        %v432 = vunpack.c.l.b16 %v318
        %v433 = vunpack.c.l.b16 %v319
        %v434 = vunpack.c.l.b16 %v320
        %v435 = vunpack.c.l.b16 %v321
        %v436 = vunpack.c.l.b16 %v322
        %v437 = vunpack.c.l.b16 %v323
        %v438 = vunpack.c.l.b16 %v324
        %v439 = vunpack.c.l.b16 %v325
        %v440 = vunpack.c.l.b16 %v326
        %v441 = vunpack.c.l.b16 %v327
        %v442 = vunpack.c.l.b16 %v328
        %v443 = vunpack.c.l.b16 %v329
        %v444 = vunpack.c.l.b16 %v330
        %v445 = vunpack.c.l.b16 %v331
        %v446 = vunpack.c.l.b16 %v332
        %v447 = vunpack.c.l.b16 %v333
        %v448 = vunpack.c.l.b16 %v334
        %v449 = vunpack.c.l.b16 %v335
        %v450 = vunpack.c.l.b16 %v336
        %v451 = vunpack.c.l.b16 %v337
        %v452 = vunpack.c.l.b16 %v338
        %v453 = vunpack.c.l.b16 %v339
        %v454 = vunpack.c.l.b16 %v340
        %v455 = vunpack.c.l.b16 %v341
        %v456 = vunpack.c.l.b16 %v342
        %v457 = vunpack.c.l.b16 %v343
        %v458 = vunpack.c.l.b16 %v344
        %v459 = vunpack.c.l.b16 %v345
        %v460 = vunpack.c.l.b16 %v346
        %v461 = vunpack.c.l.b16 %v347
        %v462 = vunpack.c.l.b16 %v348
        %v463 = vunpack.c.l.b16 %v349
        %v464 = vunpack.c.l.b16 %v350
        %v465 = vunpack.c.l.b16 %v351
        %v466 = vunpack.c.l.b16 %v352
        %v467 = vunpack.c.l.b16 %v353
        %v468 = vunpack.c.l.b16 %v354
        %v469 = vunpack.c.l.b16 %v355
        %v470 = vunpack.c.l.b16 %v356
        %v471 = vunpack.c.l.b16 %v357
        %v472 = vunpack.c.l.b16 %v358
        %v473 = vunpack.c.l.b16 %v359
        %v474 = vpack.c.b16 %v423, %v422
        %v475 = vpack.c.b16 %v425, %v424
        %v476 = vpack.c.b16 %v427, %v426
        %v477 = vpack.c.b16 %v429, %v428
        %v478 = vpack.c.b16 %v431, %v430
        %v479 = vpack.c.b16 %v433, %v432
        %v480 = vpack.c.b16 %v435, %v434
        %v481 = vpack.c.b16 %v437, %v436
        %v482 = vpack.c.b16 %v439, %v438
        %v483 = vpack.c.b16 %v441, %v440
        %v484 = vpack.c.b16 %v443, %v442
        %v485 = vpack.c.b16 %v445, %v444
        %v486 = vpack.c.b16 %v447, %v446
        %v487 = vpack.c.b16 %v449, %v448
        %v488 = vpack.c.b16 %v451, %v450
        %v489 = vpack.c.b16 %v453, %v452
        %v490 = vpack.c.b16 %v455, %v454
        %v491 = vpack.c.b16 %v457, %v456
        %v492 = vpack.c.b16 %v459, %v458
        %v493 = vpack.c.b16 %v461, %v460
        %v494 = vpack.c.b16 %v463, %v462
        %v495 = vpack.c.b16 %v465, %v464
        %v496 = vpack.c.b16 %v467, %v466
        %v497 = vpack.c.b16 %v469, %v468
        %v498 = vpack.c.b16 %v471, %v470
        %v499 = vpack.c.b16 %v473, %v472
        %v504 = vunpack.c.l.b16 %v366
        %v505 = vunpack.c.l.b16 %v367
        %v506 = vunpack.c.l.b16 %v368
        %v507 = vunpack.c.l.b16 %v369
        %v508 = vpack.c.b16 %v505, %v504
        %v509 = vpack.c.b16 %v507, %v506
        %vm511 = vcmask 228352
        %v513 = vsel %vm511, %v474, 0
        %v516 = vsel %vm511, %v475, 0
        %v519 = vsel %vm511, %v476, 0
        %v522 = vsel %vm511, %v477, 0
        %v525 = vsel %vm511, %v478, 0
        %v528 = vsel %vm511, %v479, 0
        %v531 = vsel %vm511, %v480, 0
        %v534 = vsel %vm511, %v481, 0
        %v537 = vsel %vm511, %v482, 0
        %v540 = vsel %vm511, %v483, 0
        %v543 = vsel %vm511, %v484, 0
        %v546 = vsel %vm511, %v485, 0
        %v549 = vsel %vm511, %v486, 0
        %v552 = vsel %vm511, %v487, 0
        %v555 = vsel %vm511, %v488, 0
        %v558 = vsel %vm511, %v489, 0
        %v561 = vsel %vm511, %v490, 0
        %v564 = vsel %vm511, %v491, 0
        %v567 = vsel %vm511, %v492, 0
        %v570 = vsel %vm511, %v493, 0
        %v573 = vsel %vm511, %v494, 0
        %v576 = vsel %vm511, %v495, 0
        %v579 = vsel %vm511, %v496, 0
        %v582 = vsel %vm511, %v497, 0
        %v585 = vsel %vm511, %v498, 0
        %v588 = vsel %vm511, %v499, 0
        %vm590 = vcmask 1045504
        %v592 = vsel %vm590, %v509, 0
        %594 = vmatpush.bf16.msra.mxu0 0
        %595 = vmatpush.bf16.msra.mxu0 0
        %596 = vmatpush.bf16.msra.mxu0 0
        %597 = vmatpush.bf16.msra.mxu0 0
        %598 = vmatpush.bf16.msra.mxu0 0
        %599 = vmatpush.bf16.msra.mxu0 0
        %600 = vmatpush.bf16.msra.mxu0 %v592
        %601 = vmatpush.bf16.msra.mxu0 %v508
        %602 = vmatmul.bf16.gmra.mxu0 %v513
        %v603 = vpop.f32.mrf.mxu0
        %v604 = vadd.f32 0.0, %v603
        %v605 = vpop.f32.mrf.mxu0
        %v606 = vadd.f32 0.0, %v605
        %607 = vmatmul.bf16.gmra.mxu0 %v516
        %v608 = vpop.f32.mrf.mxu0
        %v609 = vadd.f32 0.0, %v608
        %v610 = vpop.f32.mrf.mxu0
        %v611 = vadd.f32 0.0, %v610
        %612 = vmatmul.bf16.gmra.mxu0 %v519
        %v613 = vpop.f32.mrf.mxu0
        %v614 = vadd.f32 0.0, %v613
        %v615 = vpop.f32.mrf.mxu0
        %v616 = vadd.f32 0.0, %v615
        %617 = vmatmul.bf16.gmra.mxu0 %v522
        %v618 = vpop.f32.mrf.mxu0
        %v619 = vadd.f32 0.0, %v618
        %v620 = vpop.f32.mrf.mxu0
        %v621 = vadd.f32 0.0, %v620
        %622 = vmatmul.bf16.gmra.mxu0 %v525
        %v623 = vpop.f32.mrf.mxu0
        %v624 = vadd.f32 0.0, %v623
        %v625 = vpop.f32.mrf.mxu0
        %v626 = vadd.f32 0.0, %v625
        %627 = vmatmul.bf16.gmra.mxu0 %v528
        %v628 = vpop.f32.mrf.mxu0
        %v629 = vadd.f32 0.0, %v628
        %v630 = vpop.f32.mrf.mxu0
        %v631 = vadd.f32 0.0, %v630
        %632 = vmatmul.bf16.gmra.mxu0 %v531
        %v633 = vpop.f32.mrf.mxu0
        %v634 = vadd.f32 0.0, %v633
        %v635 = vpop.f32.mrf.mxu0
        %v636 = vadd.f32 0.0, %v635
        %637 = vmatmul.bf16.gmra.mxu0 %v534
        %v638 = vpop.f32.mrf.mxu0
        %v639 = vadd.f32 0.0, %v638
        %v640 = vpop.f32.mrf.mxu0
        %v641 = vadd.f32 0.0, %v640
        %642 = vmatmul.bf16.gmra.mxu0 %v537
        %v643 = vpop.f32.mrf.mxu0
        %v644 = vadd.f32 0.0, %v643
        %v645 = vpop.f32.mrf.mxu0
        %v646 = vadd.f32 0.0, %v645
        %647 = vmatmul.bf16.gmra.mxu0 %v540
        %v648 = vpop.f32.mrf.mxu0
        %v649 = vadd.f32 0.0, %v648
        %v650 = vpop.f32.mrf.mxu0
        %v651 = vadd.f32 0.0, %v650
        %652 = vmatmul.bf16.gmra.mxu0 %v543
        %v653 = vpop.f32.mrf.mxu0
        %v654 = vadd.f32 0.0, %v653
        %v655 = vpop.f32.mrf.mxu0
        %v656 = vadd.f32 0.0, %v655
        %657 = vmatmul.bf16.gmra.mxu0 %v546
        %v658 = vpop.f32.mrf.mxu0
        %v659 = vadd.f32 0.0, %v658
        %v660 = vpop.f32.mrf.mxu0
        %v661 = vadd.f32 0.0, %v660
        %662 = vmatmul.bf16.gmra.mxu0 %v549
        %v663 = vpop.f32.mrf.mxu0
        %v664 = vadd.f32 0.0, %v663
        %v665 = vpop.f32.mrf.mxu0
        %v666 = vadd.f32 0.0, %v665
        %667 = vmatmul.bf16.gmra.mxu0 %v552
        %v668 = vpop.f32.mrf.mxu0
        %v669 = vadd.f32 0.0, %v668
        %v670 = vpop.f32.mrf.mxu0
        %v671 = vadd.f32 0.0, %v670
        %672 = vmatmul.bf16.gmra.mxu0 %v555
        %v673 = vpop.f32.mrf.mxu0
        %v674 = vadd.f32 0.0, %v673
        %v675 = vpop.f32.mrf.mxu0
        %v676 = vadd.f32 0.0, %v675
        %677 = vmatmul.bf16.gmra.mxu0 %v558
        %v678 = vpop.f32.mrf.mxu0
        %v679 = vadd.f32 0.0, %v678
        %v680 = vpop.f32.mrf.mxu0
        %v681 = vadd.f32 0.0, %v680
        %682 = vmatmul.bf16.gmra.mxu0 %v561
        %v683 = vpop.f32.mrf.mxu0
        %v684 = vadd.f32 0.0, %v683
        %v685 = vpop.f32.mrf.mxu0
        %v686 = vadd.f32 0.0, %v685
        %687 = vmatmul.bf16.gmra.mxu0 %v564
        %v688 = vpop.f32.mrf.mxu0
        %v689 = vadd.f32 0.0, %v688
        %v690 = vpop.f32.mrf.mxu0
        %v691 = vadd.f32 0.0, %v690
        %692 = vmatmul.bf16.gmra.mxu0 %v567
        %v693 = vpop.f32.mrf.mxu0
        %v694 = vadd.f32 0.0, %v693
        %v695 = vpop.f32.mrf.mxu0
        %v696 = vadd.f32 0.0, %v695
        %697 = vmatmul.bf16.gmra.mxu0 %v570
        %v698 = vpop.f32.mrf.mxu0
        %v699 = vadd.f32 0.0, %v698
        %v700 = vpop.f32.mrf.mxu0
        %v701 = vadd.f32 0.0, %v700
        %702 = vmatmul.bf16.gmra.mxu0 %v573
        %v703 = vpop.f32.mrf.mxu0
        %v704 = vadd.f32 0.0, %v703
        %v705 = vpop.f32.mrf.mxu0
        %v706 = vadd.f32 0.0, %v705
        %707 = vmatmul.bf16.gmra.mxu0 %v576
        %v708 = vpop.f32.mrf.mxu0
        %v709 = vadd.f32 0.0, %v708
        %v710 = vpop.f32.mrf.mxu0
        %v711 = vadd.f32 0.0, %v710
        %712 = vmatmul.bf16.gmra.mxu0 %v579
        %v713 = vpop.f32.mrf.mxu0
        %v714 = vadd.f32 0.0, %v713
        %v715 = vpop.f32.mrf.mxu0
        %v716 = vadd.f32 0.0, %v715
        %717 = vmatmul.bf16.gmra.mxu0 %v582
        %v718 = vpop.f32.mrf.mxu0
        %v719 = vadd.f32 0.0, %v718
        %v720 = vpop.f32.mrf.mxu0
        %v721 = vadd.f32 0.0, %v720
        %722 = vmatmul.bf16.gmra.mxu0 %v585
        %v723 = vpop.f32.mrf.mxu0
        %v724 = vadd.f32 0.0, %v723
        %v725 = vpop.f32.mrf.mxu0
        %v726 = vadd.f32 0.0, %v725
        %727 = vmatmul.bf16.gmra.mxu0 %v588
        %v728 = vpop.f32.mrf.mxu0
        %v729 = vadd.f32 0.0, %v728
        %v730 = vpop.f32.mrf.mxu0
        %v731 = vadd.f32 0.0, %v730
        %732 = vdwg.mxu0
        %v735 = vunpack.c.l.b16 %v306
        %v736 = vunpack.c.l.b16 %v307
        %v737 = vpack.c.b16 %v736, %v735
        %v742 = vunpack.c.l.b16 %v362
        %v743 = vunpack.c.l.b16 %v363
        %v744 = vunpack.c.l.b16 %v364
        %v745 = vunpack.c.l.b16 %v365
        %v746 = vpack.c.b16 %v743, %v742
        %v747 = vpack.c.b16 %v745, %v744
        %v750 = vsel %vm511, %v737, 0
        %v753 = vsel %vm590, %v747, 0
        %755 = vmatpush.bf16.msra.mxu0 0
        %756 = vmatpush.bf16.msra.mxu0 0
        %757 = vmatpush.bf16.msra.mxu0 0
        %758 = vmatpush.bf16.msra.mxu0 0
        %759 = vmatpush.bf16.msra.mxu0 0
        %760 = vmatpush.bf16.msra.mxu0 0
        %761 = vmatpush.bf16.msra.mxu0 %v753
        %762 = vmatpush.bf16.msra.mxu0 %v746
        %763 = vmatmul.bf16.gmra.mxu0 %v750
        %v764 = vpop.f32.mrf.mxu0
        %v765 = vadd.f32 %v604, %v764
        %v766 = vpop.f32.mrf.mxu0
        %v767 = vadd.f32 %v606, %v766
        %768 = vmatmul.bf16.gmra.mxu0 %v513
        %v769 = vpop.f32.mrf.mxu0
        %v770 = vadd.f32 %v609, %v769
        %v771 = vpop.f32.mrf.mxu0
        %v772 = vadd.f32 %v611, %v771
        %773 = vmatmul.bf16.gmra.mxu0 %v516
        %v774 = vpop.f32.mrf.mxu0
        %v775 = vadd.f32 %v614, %v774
        %v776 = vpop.f32.mrf.mxu0
        %v777 = vadd.f32 %v616, %v776
        %778 = vmatmul.bf16.gmra.mxu0 %v519
        %v779 = vpop.f32.mrf.mxu0
        %v780 = vadd.f32 %v619, %v779
        %v781 = vpop.f32.mrf.mxu0
        %v782 = vadd.f32 %v621, %v781
        %783 = vmatmul.bf16.gmra.mxu0 %v522
        %v784 = vpop.f32.mrf.mxu0
        %v785 = vadd.f32 %v624, %v784
        %v786 = vpop.f32.mrf.mxu0
        %v787 = vadd.f32 %v626, %v786
        %788 = vmatmul.bf16.gmra.mxu0 %v525
        %v789 = vpop.f32.mrf.mxu0
        %v790 = vadd.f32 %v629, %v789
        %v791 = vpop.f32.mrf.mxu0
        %v792 = vadd.f32 %v631, %v791
        %793 = vmatmul.bf16.gmra.mxu0 %v528
        %v794 = vpop.f32.mrf.mxu0
        %v795 = vadd.f32 %v634, %v794
        %v796 = vpop.f32.mrf.mxu0
        %v797 = vadd.f32 %v636, %v796
        %798 = vmatmul.bf16.gmra.mxu0 %v531
        %v799 = vpop.f32.mrf.mxu0
        %v800 = vadd.f32 %v639, %v799
        %v801 = vpop.f32.mrf.mxu0
        %v802 = vadd.f32 %v641, %v801
        %803 = vmatmul.bf16.gmra.mxu0 %v534
        %v804 = vpop.f32.mrf.mxu0
        %v805 = vadd.f32 %v644, %v804
        %v806 = vpop.f32.mrf.mxu0
        %v807 = vadd.f32 %v646, %v806
        %808 = vmatmul.bf16.gmra.mxu0 %v537
        %v809 = vpop.f32.mrf.mxu0
        %v810 = vadd.f32 %v649, %v809
        %v811 = vpop.f32.mrf.mxu0
        %v812 = vadd.f32 %v651, %v811
        %813 = vmatmul.bf16.gmra.mxu0 %v540
        %v814 = vpop.f32.mrf.mxu0
        %v815 = vadd.f32 %v654, %v814
        %v816 = vpop.f32.mrf.mxu0
        %v817 = vadd.f32 %v656, %v816
        %818 = vmatmul.bf16.gmra.mxu0 %v543
        %v819 = vpop.f32.mrf.mxu0
        %v820 = vadd.f32 %v659, %v819
        %v821 = vpop.f32.mrf.mxu0
        %v822 = vadd.f32 %v661, %v821
        %823 = vmatmul.bf16.gmra.mxu0 %v546
        %v824 = vpop.f32.mrf.mxu0
        %v825 = vadd.f32 %v664, %v824
        %v826 = vpop.f32.mrf.mxu0
        %v827 = vadd.f32 %v666, %v826
        %828 = vmatmul.bf16.gmra.mxu0 %v549
        %v829 = vpop.f32.mrf.mxu0
        %v830 = vadd.f32 %v669, %v829
        %v831 = vpop.f32.mrf.mxu0
        %v832 = vadd.f32 %v671, %v831
        %833 = vmatmul.bf16.gmra.mxu0 %v552
        %v834 = vpop.f32.mrf.mxu0
        %v835 = vadd.f32 %v674, %v834
        %v836 = vpop.f32.mrf.mxu0
        %v837 = vadd.f32 %v676, %v836
        %838 = vmatmul.bf16.gmra.mxu0 %v555
        %v839 = vpop.f32.mrf.mxu0
        %v840 = vadd.f32 %v679, %v839
        %v841 = vpop.f32.mrf.mxu0
        %v842 = vadd.f32 %v681, %v841
        %843 = vmatmul.bf16.gmra.mxu0 %v558
        %v844 = vpop.f32.mrf.mxu0
        %v845 = vadd.f32 %v684, %v844
        %v846 = vpop.f32.mrf.mxu0
        %v847 = vadd.f32 %v686, %v846
        %848 = vmatmul.bf16.gmra.mxu0 %v561
        %v849 = vpop.f32.mrf.mxu0
        %v850 = vadd.f32 %v689, %v849
        %v851 = vpop.f32.mrf.mxu0
        %v852 = vadd.f32 %v691, %v851
        %853 = vmatmul.bf16.gmra.mxu0 %v564
        %v854 = vpop.f32.mrf.mxu0
        %v855 = vadd.f32 %v694, %v854
        %v856 = vpop.f32.mrf.mxu0
        %v857 = vadd.f32 %v696, %v856
        %858 = vmatmul.bf16.gmra.mxu0 %v567
        %v859 = vpop.f32.mrf.mxu0
        %v860 = vadd.f32 %v699, %v859
        %v861 = vpop.f32.mrf.mxu0
        %v862 = vadd.f32 %v701, %v861
        %863 = vmatmul.bf16.gmra.mxu0 %v570
        %v864 = vpop.f32.mrf.mxu0
        %v865 = vadd.f32 %v704, %v864
        %v866 = vpop.f32.mrf.mxu0
        %v867 = vadd.f32 %v706, %v866
        %868 = vmatmul.bf16.gmra.mxu0 %v573
        %v869 = vpop.f32.mrf.mxu0
        %v870 = vadd.f32 %v709, %v869
        %v871 = vpop.f32.mrf.mxu0
        %v872 = vadd.f32 %v711, %v871
        %873 = vmatmul.bf16.gmra.mxu0 %v576
        %v874 = vpop.f32.mrf.mxu0
        %v875 = vadd.f32 %v714, %v874
        %v876 = vpop.f32.mrf.mxu0
        %v877 = vadd.f32 %v716, %v876
        %878 = vmatmul.bf16.gmra.mxu0 %v579
        %v879 = vpop.f32.mrf.mxu0
        %v880 = vadd.f32 %v719, %v879
        %v881 = vpop.f32.mrf.mxu0
        %v882 = vadd.f32 %v721, %v881
        %883 = vmatmul.bf16.gmra.mxu0 %v582
        %v884 = vpop.f32.mrf.mxu0
        %v885 = vadd.f32 %v724, %v884
        %v886 = vpop.f32.mrf.mxu0
        %v887 = vadd.f32 %v726, %v886
        %888 = vmatmul.bf16.gmra.mxu0 %v585
        %v889 = vpop.f32.mrf.mxu0
        %v890 = vadd.f32 %v729, %v889
        %v891 = vpop.f32.mrf.mxu0
        %v892 = vadd.f32 %v731, %v891
        %893 = vdwg.mxu0
        %v894 = vld [vmem:[#allocation5 + $0x20] sm:$0xf]
        %v895 = vld [vmem:[#allocation5 + $0x24] sm:$0xf]
        %v896 = vld [vmem:[#allocation5 + $0x28] sm:$0xf]
        %v897 = vld [vmem:[#allocation5 + $0x2c] sm:$0x3]
        %v900 = vunpack.c.l.b16 %v360
        %v901 = vunpack.c.l.b16 %v361
        %v902 = vpack.c.b16 %v901, %v900
        %v907 = vunpack.c.l.b16 %v894
        %v908 = vunpack.c.l.b16 %v895
        %v909 = vunpack.c.l.b16 %v896
        %v910 = vunpack.c.l.b16 %v897
        %v911 = vpack.c.b16 %v908, %v907
        %v912 = vpack.c.b16 %v910, %v909
        %v915 = vsel %vm511, %v902, 0
        %v918 = vsel %vm590, %v912, 0
        %920 = vmatpush.bf16.msra.mxu0 0
        %921 = vmatpush.bf16.msra.mxu0 0
        %922 = vmatpush.bf16.msra.mxu0 0
        %923 = vmatpush.bf16.msra.mxu0 0
        %924 = vmatpush.bf16.msra.mxu0 0
        %925 = vmatpush.bf16.msra.mxu0 0
        %926 = vmatpush.bf16.msra.mxu0 %v918
        %927 = vmatpush.bf16.msra.mxu0 %v911
        %928 = vmatmul.bf16.gmra.mxu0 %v516
        %v929 = vpop.f32.mrf.mxu0
        %v930 = vadd.f32 0.0, %v929
        %v931 = vpop.f32.mrf.mxu0
        %v932 = vadd.f32 0.0, %v931
        %933 = vmatmul.bf16.gmra.mxu0 %v519
        %v934 = vpop.f32.mrf.mxu0
        %v935 = vadd.f32 0.0, %v934
        %v936 = vpop.f32.mrf.mxu0
        %v937 = vadd.f32 0.0, %v936
        %938 = vmatmul.bf16.gmra.mxu0 %v522
        %v939 = vpop.f32.mrf.mxu0
        %v940 = vadd.f32 0.0, %v939
        %v941 = vpop.f32.mrf.mxu0
        %v942 = vadd.f32 0.0, %v941
        %943 = vmatmul.bf16.gmra.mxu0 %v525
        %v944 = vpop.f32.mrf.mxu0
        %v945 = vadd.f32 0.0, %v944
        %v946 = vpop.f32.mrf.mxu0
        %v947 = vadd.f32 0.0, %v946
        %948 = vmatmul.bf16.gmra.mxu0 %v528
        %v949 = vpop.f32.mrf.mxu0
        %v950 = vadd.f32 0.0, %v949
        %v951 = vpop.f32.mrf.mxu0
        %v952 = vadd.f32 0.0, %v951
        %953 = vmatmul.bf16.gmra.mxu0 %v531
        %v954 = vpop.f32.mrf.mxu0
        %v955 = vadd.f32 0.0, %v954
        %v956 = vpop.f32.mrf.mxu0
        %v957 = vadd.f32 0.0, %v956
        %958 = vmatmul.bf16.gmra.mxu0 %v534
        %v959 = vpop.f32.mrf.mxu0
        %v960 = vadd.f32 0.0, %v959
        %v961 = vpop.f32.mrf.mxu0
        %v962 = vadd.f32 0.0, %v961
        %963 = vmatmul.bf16.gmra.mxu0 %v537
        %v964 = vpop.f32.mrf.mxu0
        %v965 = vadd.f32 0.0, %v964
        %v966 = vpop.f32.mrf.mxu0
        %v967 = vadd.f32 0.0, %v966
        %968 = vmatmul.bf16.gmra.mxu0 %v540
        %v969 = vpop.f32.mrf.mxu0
        %v970 = vadd.f32 0.0, %v969
        %v971 = vpop.f32.mrf.mxu0
        %v972 = vadd.f32 0.0, %v971
        %973 = vmatmul.bf16.gmra.mxu0 %v543
        %v974 = vpop.f32.mrf.mxu0
        %v975 = vadd.f32 0.0, %v974
        %v976 = vpop.f32.mrf.mxu0
        %v977 = vadd.f32 0.0, %v976
        %978 = vmatmul.bf16.gmra.mxu0 %v546
        %v979 = vpop.f32.mrf.mxu0
        %v980 = vadd.f32 0.0, %v979
        %v981 = vpop.f32.mrf.mxu0
        %v982 = vadd.f32 0.0, %v981
        %983 = vmatmul.bf16.gmra.mxu0 %v549
        %v984 = vpop.f32.mrf.mxu0
        %v985 = vadd.f32 0.0, %v984
        %v986 = vpop.f32.mrf.mxu0
        %v987 = vadd.f32 0.0, %v986
        %988 = vmatmul.bf16.gmra.mxu0 %v552
        %v989 = vpop.f32.mrf.mxu0
        %v990 = vadd.f32 0.0, %v989
        %v991 = vpop.f32.mrf.mxu0
        %v992 = vadd.f32 0.0, %v991
        %993 = vmatmul.bf16.gmra.mxu0 %v555
        %v994 = vpop.f32.mrf.mxu0
        %v995 = vadd.f32 0.0, %v994
        %v996 = vpop.f32.mrf.mxu0
        %v997 = vadd.f32 0.0, %v996
        %998 = vmatmul.bf16.gmra.mxu0 %v558
        %v999 = vpop.f32.mrf.mxu0
        %v1000 = vadd.f32 0.0, %v999
        %v1001 = vpop.f32.mrf.mxu0
        %v1002 = vadd.f32 0.0, %v1001
        %1003 = vmatmul.bf16.gmra.mxu0 %v561
        %v1004 = vpop.f32.mrf.mxu0
        %v1005 = vadd.f32 0.0, %v1004
        %v1006 = vpop.f32.mrf.mxu0
        %v1007 = vadd.f32 0.0, %v1006
        %1008 = vmatmul.bf16.gmra.mxu0 %v564
        %v1009 = vpop.f32.mrf.mxu0
        %v1010 = vadd.f32 0.0, %v1009
        %v1011 = vpop.f32.mrf.mxu0
        %v1012 = vadd.f32 0.0, %v1011
        %1013 = vmatmul.bf16.gmra.mxu0 %v567
        %v1014 = vpop.f32.mrf.mxu0
        %v1015 = vadd.f32 0.0, %v1014
        %v1016 = vpop.f32.mrf.mxu0
        %v1017 = vadd.f32 0.0, %v1016
        %1018 = vmatmul.bf16.gmra.mxu0 %v570
        %v1019 = vpop.f32.mrf.mxu0
        %v1020 = vadd.f32 0.0, %v1019
        %v1021 = vpop.f32.mrf.mxu0
        %v1022 = vadd.f32 0.0, %v1021
        %1023 = vmatmul.bf16.gmra.mxu0 %v573
        %v1024 = vpop.f32.mrf.mxu0
        %v1025 = vadd.f32 0.0, %v1024
        %v1026 = vpop.f32.mrf.mxu0
        %v1027 = vadd.f32 0.0, %v1026
        %1028 = vmatmul.bf16.gmra.mxu0 %v576
        %v1029 = vpop.f32.mrf.mxu0
        %v1030 = vadd.f32 0.0, %v1029
        %v1031 = vpop.f32.mrf.mxu0
        %v1032 = vadd.f32 0.0, %v1031
        %1033 = vmatmul.bf16.gmra.mxu0 %v579
        %v1034 = vpop.f32.mrf.mxu0
        %v1035 = vadd.f32 0.0, %v1034
        %v1036 = vpop.f32.mrf.mxu0
        %v1037 = vadd.f32 0.0, %v1036
        %1038 = vmatmul.bf16.gmra.mxu0 %v582
        %v1039 = vpop.f32.mrf.mxu0
        %v1040 = vadd.f32 0.0, %v1039
        %v1041 = vpop.f32.mrf.mxu0
        %v1042 = vadd.f32 0.0, %v1041
        %1043 = vmatmul.bf16.gmra.mxu0 %v585
        %v1044 = vpop.f32.mrf.mxu0
        %v1045 = vadd.f32 0.0, %v1044
        %v1046 = vpop.f32.mrf.mxu0
        %v1047 = vadd.f32 0.0, %v1046
        %1048 = vmatmul.bf16.gmra.mxu0 %v588
        %v1049 = vpop.f32.mrf.mxu0
        %v1050 = vadd.f32 0.0, %v1049
        %v1051 = vpop.f32.mrf.mxu0
        %v1052 = vadd.f32 0.0, %v1051
        %1053 = vmatmul.bf16.gmra.mxu0 %v915
        %v1054 = vpop.f32.mrf.mxu0
        %v1055 = vadd.f32 0.0, %v1054
        %v1056 = vpop.f32.mrf.mxu0
        %v1057 = vadd.f32 0.0, %v1056
        %1058 = vdwg.mxu0
        %v1059 = vadd.f32 %v765, %v930
        %v1060 = vadd.f32 %v767, %v932
        %v1061 = vadd.f32 %v770, %v935
        %v1062 = vadd.f32 %v772, %v937
        %v1063 = vadd.f32 %v775, %v940
        %v1064 = vadd.f32 %v777, %v942
        %v1065 = vadd.f32 %v780, %v945
        %v1066 = vadd.f32 %v782, %v947
        %v1067 = vadd.f32 %v785, %v950
        %v1068 = vadd.f32 %v787, %v952
        %v1069 = vadd.f32 %v790, %v955
        %v1070 = vadd.f32 %v792, %v957
        %v1071 = vadd.f32 %v795, %v960
        %v1072 = vadd.f32 %v797, %v962
        %v1073 = vadd.f32 %v800, %v965
        %v1074 = vadd.f32 %v802, %v967
        %v1075 = vadd.f32 %v805, %v970
        %v1076 = vadd.f32 %v807, %v972
        %v1077 = vadd.f32 %v810, %v975
        %v1078 = vadd.f32 %v812, %v977
        %v1079 = vadd.f32 %v815, %v980
        %v1080 = vadd.f32 %v817, %v982
        %v1081 = vadd.f32 %v820, %v985
        %v1082 = vadd.f32 %v822, %v987
        %v1083 = vadd.f32 %v825, %v990
        %v1084 = vadd.f32 %v827, %v992
        %v1085 = vadd.f32 %v830, %v995
        %v1086 = vadd.f32 %v832, %v997
        %v1087 = vadd.f32 %v835, %v1000
        %v1088 = vadd.f32 %v837, %v1002
        %v1089 = vadd.f32 %v840, %v1005
        %v1090 = vadd.f32 %v842, %v1007
        %v1091 = vadd.f32 %v845, %v1010
        %v1092 = vadd.f32 %v847, %v1012
        %v1093 = vadd.f32 %v850, %v1015
        %v1094 = vadd.f32 %v852, %v1017
        %v1095 = vadd.f32 %v855, %v1020
        %v1096 = vadd.f32 %v857, %v1022
        %v1097 = vadd.f32 %v860, %v1025
        %v1098 = vadd.f32 %v862, %v1027
        %v1099 = vadd.f32 %v865, %v1030
        %v1100 = vadd.f32 %v867, %v1032
        %v1101 = vadd.f32 %v870, %v1035
        %v1102 = vadd.f32 %v872, %v1037
        %v1103 = vadd.f32 %v875, %v1040
        %v1104 = vadd.f32 %v877, %v1042
        %v1105 = vadd.f32 %v880, %v1045
        %v1106 = vadd.f32 %v882, %v1047
        %v1107 = vadd.f32 %v885, %v1050
        %v1108 = vadd.f32 %v887, %v1052
        %v1109 = vadd.f32 %v890, %v1055
        %v1110 = vadd.f32 %v892, %v1057
        %v1111 = vld [vmem:[#allocation7] sm:$0x1]
        %v1112 = vperm.slane %v1111, 0
        %v1113 = vadd.f32 %v1059, %v1112
        %v1114 = vadd.f32 %v1060, %v1112
        %v1115 = vadd.f32 %v1061, %v1112
        %v1116 = vadd.f32 %v1062, %v1112
        %v1117 = vadd.f32 %v1063, %v1112
        %v1118 = vadd.f32 %v1064, %v1112
        %v1119 = vadd.f32 %v1065, %v1112
        %v1120 = vadd.f32 %v1066, %v1112
        %v1121 = vadd.f32 %v1067, %v1112
        %v1122 = vadd.f32 %v1068, %v1112
        %v1123 = vadd.f32 %v1069, %v1112
        %v1124 = vadd.f32 %v1070, %v1112
        %v1125 = vadd.f32 %v1071, %v1112
        %v1126 = vadd.f32 %v1072, %v1112
        %v1127 = vadd.f32 %v1073, %v1112
        %v1128 = vadd.f32 %v1074, %v1112
        %v1129 = vadd.f32 %v1075, %v1112
        %v1130 = vadd.f32 %v1076, %v1112
        %v1131 = vadd.f32 %v1077, %v1112
        %v1132 = vadd.f32 %v1078, %v1112
        %v1133 = vadd.f32 %v1079, %v1112
        %v1134 = vadd.f32 %v1080, %v1112
        %v1135 = vadd.f32 %v1081, %v1112
        %v1136 = vadd.f32 %v1082, %v1112
        %v1137 = vadd.f32 %v1083, %v1112
        %v1138 = vadd.f32 %v1084, %v1112
        %v1139 = vadd.f32 %v1085, %v1112
        %v1140 = vadd.f32 %v1086, %v1112
        %v1141 = vadd.f32 %v1087, %v1112
        %v1142 = vadd.f32 %v1088, %v1112
        %v1143 = vadd.f32 %v1089, %v1112
        %v1144 = vadd.f32 %v1090, %v1112
        %v1145 = vadd.f32 %v1091, %v1112
        %v1146 = vadd.f32 %v1092, %v1112
        %v1147 = vadd.f32 %v1093, %v1112
        %v1148 = vadd.f32 %v1094, %v1112
        %v1149 = vadd.f32 %v1095, %v1112
        %v1150 = vadd.f32 %v1096, %v1112
        %v1151 = vadd.f32 %v1097, %v1112
        %v1152 = vadd.f32 %v1098, %v1112
        %v1153 = vadd.f32 %v1099, %v1112
        %v1154 = vadd.f32 %v1100, %v1112
        %v1155 = vadd.f32 %v1101, %v1112
        %v1156 = vadd.f32 %v1102, %v1112
        %v1157 = vadd.f32 %v1103, %v1112
        %v1158 = vadd.f32 %v1104, %v1112
        %v1159 = vadd.f32 %v1105, %v1112
        %v1160 = vadd.f32 %v1106, %v1112
        %v1161 = vadd.f32 %v1107, %v1112
        %v1162 = vadd.f32 %v1108, %v1112
        %v1163 = vadd.f32 %v1109, %v1112
        %v1164 = vadd.f32 %v1110, %v1112
        %v1165 = vmax.f32 %v1113, 0.0
        %v1166 = vmax.f32 %v1114, 0.0
        %v1167 = vmax.f32 %v1115, 0.0
        %v1168 = vmax.f32 %v1116, 0.0
        %v1169 = vmax.f32 %v1117, 0.0
        %v1170 = vmax.f32 %v1118, 0.0
        %v1171 = vmax.f32 %v1119, 0.0
        %v1172 = vmax.f32 %v1120, 0.0
        %v1173 = vmax.f32 %v1121, 0.0
        %v1174 = vmax.f32 %v1122, 0.0
        %v1175 = vmax.f32 %v1123, 0.0
        %v1176 = vmax.f32 %v1124, 0.0
        %v1177 = vmax.f32 %v1125, 0.0
        %v1178 = vmax.f32 %v1126, 0.0
        %v1179 = vmax.f32 %v1127, 0.0
        %v1180 = vmax.f32 %v1128, 0.0
        %v1181 = vmax.f32 %v1129, 0.0
        %v1182 = vmax.f32 %v1130, 0.0
        %v1183 = vmax.f32 %v1131, 0.0
        %v1184 = vmax.f32 %v1132, 0.0
        %v1185 = vmax.f32 %v1133, 0.0
        %v1186 = vmax.f32 %v1134, 0.0
        %v1187 = vmax.f32 %v1135, 0.0
        %v1188 = vmax.f32 %v1136, 0.0
        %v1189 = vmax.f32 %v1137, 0.0
        %v1190 = vmax.f32 %v1138, 0.0
        %v1191 = vmax.f32 %v1139, 0.0
        %v1192 = vmax.f32 %v1140, 0.0
        %v1193 = vmax.f32 %v1141, 0.0
        %v1194 = vmax.f32 %v1142, 0.0
        %v1195 = vmax.f32 %v1143, 0.0
        %v1196 = vmax.f32 %v1144, 0.0
        %v1197 = vmax.f32 %v1145, 0.0
        %v1198 = vmax.f32 %v1146, 0.0
        %v1199 = vmax.f32 %v1147, 0.0
        %v1200 = vmax.f32 %v1148, 0.0
        %v1201 = vmax.f32 %v1149, 0.0
        %v1202 = vmax.f32 %v1150, 0.0
        %v1203 = vmax.f32 %v1151, 0.0
        %v1204 = vmax.f32 %v1152, 0.0
        %v1205 = vmax.f32 %v1153, 0.0
        %v1206 = vmax.f32 %v1154, 0.0
        %v1207 = vmax.f32 %v1155, 0.0
        %v1208 = vmax.f32 %v1156, 0.0
        %v1209 = vmax.f32 %v1157, 0.0
        %v1210 = vmax.f32 %v1158, 0.0
        %v1211 = vmax.f32 %v1159, 0.0
        %v1212 = vmax.f32 %v1160, 0.0
        %v1213 = vmax.f32 %v1161, 0.0
        %v1214 = vmax.f32 %v1162, 0.0
        %v1215 = vmax.f32 %v1163, 0.0
        %v1216 = vmax.f32 %v1164, 0.0
        %v1217 = vmax.f32 %v1165, %v1167
        %v1218 = vmax.f32 %v1166, %v1168
        %v1219 = vmax.f32 %v1169, %v1171
        %v1220 = vmax.f32 %v1170, %v1172
        %v1221 = vmax.f32 %v1173, %v1175
        %v1222 = vmax.f32 %v1174, %v1176
        %v1223 = vmax.f32 %v1177, %v1179
        %v1224 = vmax.f32 %v1178, %v1180
        %v1225 = vmax.f32 %v1181, %v1183
        %v1226 = vmax.f32 %v1182, %v1184
        %v1227 = vmax.f32 %v1185, %v1187
        %v1228 = vmax.f32 %v1186, %v1188
        %v1229 = vmax.f32 %v1189, %v1191
        %v1230 = vmax.f32 %v1190, %v1192
        %v1231 = vmax.f32 %v1193, %v1195
        %v1232 = vmax.f32 %v1194, %v1196
        %v1233 = vmax.f32 %v1197, %v1199
        %v1234 = vmax.f32 %v1198, %v1200
        %v1235 = vmax.f32 %v1201, %v1203
        %v1236 = vmax.f32 %v1202, %v1204
        %v1237 = vmax.f32 %v1205, %v1207
        %v1238 = vmax.f32 %v1206, %v1208
        %v1239 = vmax.f32 %v1209, %v1211
        %v1240 = vmax.f32 %v1210, %v1212
        %v1241 = vmax.f32 %v1213, %v1215
        %v1242 = vmax.f32 %v1214, %v1216
        %v1243 = vpack.c.bf16 %v1218, %v1217
        %v1244 = vpack.c.bf16 %v1220, %v1219
        %v1245 = vpack.c.bf16 %v1222, %v1221
        %v1246 = vpack.c.bf16 %v1224, %v1223
        %v1247 = vpack.c.bf16 %v1226, %v1225
        %v1248 = vpack.c.bf16 %v1228, %v1227
        %v1249 = vpack.c.bf16 %v1230, %v1229
        %v1250 = vpack.c.bf16 %v1232, %v1231
        %v1251 = vpack.c.bf16 %v1234, %v1233
        %v1252 = vpack.c.bf16 %v1236, %v1235
        %v1253 = vpack.c.bf16 %v1238, %v1237
        %v1254 = vpack.c.bf16 %v1240, %v1239
        %v1255 = vpack.c.bf16 %v1242, %v1241
        %v1256 = vld [vmem:[#allocation5 + $0x84] sm:$0xf]
        %v1257 = vld [vmem:[#allocation5 + $0x88] sm:$0xf]
        %v1258 = vld [vmem:[#allocation5 + $0x8c] sm:$0xf]
        %v1259 = vld [vmem:[#allocation5 + $0x90] sm:$0xf]
        %v1260 = vld [vmem:[#allocation5 + $0x94] sm:$0xf]
        %v1261 = vld [vmem:[#allocation5 + $0x98] sm:$0xf]
        %v1262 = vld [vmem:[#allocation5 + $0x9c] sm:$0xf]
        %v1263 = vld [vmem:[#allocation5 + $0xa0] sm:$0xf]
        %v1264 = vld [vmem:[#allocation5 + $0xa4] sm:$0xf]
        %v1265 = vld [vmem:[#allocation5 + $0xa8] sm:$0xf]
        %v1266 = vld [vmem:[#allocation5 + $0xac] sm:$0xf]
        %v1267 = vld [vmem:[#allocation5 + $0xb0] sm:$0xf]
        %v1268 = vld [vmem:[#allocation5 + $0xb4] sm:$0xf]
        %v1282 = vunpack.c.l.b16 %v1256
        %v1283 = vunpack.c.l.b16 %v1257
        %v1284 = vunpack.c.l.b16 %v1258
        %v1285 = vunpack.c.l.b16 %v1259
        %v1286 = vunpack.c.l.b16 %v1260
        %v1287 = vunpack.c.l.b16 %v1261
        %v1288 = vunpack.c.l.b16 %v1262
        %v1289 = vunpack.c.l.b16 %v1263
        %v1290 = vunpack.c.l.b16 %v1264
        %v1291 = vunpack.c.l.b16 %v1265
        %v1292 = vunpack.c.l.b16 %v1266
        %v1293 = vunpack.c.l.b16 %v1267
        %v1294 = vunpack.c.l.b16 %v1268
        %v1295 = vpack.c.b16 %v1283, %v1282
        %v1296 = vpack.c.b16 %v1285, %v1284
        %v1297 = vpack.c.b16 %v1287, %v1286
        %v1298 = vpack.c.b16 %v1289, %v1288
        %v1299 = vpack.c.b16 %v1291, %v1290
        %v1300 = vpack.c.b16 %v1293, %v1292
        %v1301 = vpack.c.b16 %v1294, %v1294
        %vm1308 = vcmask 850944
        %v1310 = vsel %vm1308, %v1243, 0
        %v1313 = vsel %vm1308, %v1244, 0
        %v1316 = vsel %vm1308, %v1245, 0
        %v1319 = vsel %vm1308, %v1246, 0
        %v1322 = vsel %vm1308, %v1247, 0
        %v1325 = vsel %vm1308, %v1248, 0
        %v1328 = vsel %vm1308, %v1249, 0
        %v1331 = vsel %vm1308, %v1250, 0
        %v1334 = vsel %vm1308, %v1251, 0
        %v1337 = vsel %vm1308, %v1252, 0
        %v1340 = vsel %vm1308, %v1253, 0
        %v1343 = vsel %vm1308, %v1254, 0
        %v1346 = vsel %vm1308, %v1255, 0
        %vm1348 = vcmask 1043456
        %v1350 = vsel %vm1348, %v1301, 0
        %1352 = vmatpush.bf16.msra.mxu0 0
        %1353 = vmatpush.bf16.msra.mxu0 %v1350
        %1354 = vmatpush.bf16.msra.mxu0 %v1300
        %1355 = vmatpush.bf16.msra.mxu0 %v1299
        %1356 = vmatpush.bf16.msra.mxu0 %v1298
        %1357 = vmatpush.bf16.msra.mxu0 %v1297
        %1358 = vmatpush.bf16.msra.mxu0 %v1296
        %1359 = vmatpush.bf16.msra.mxu0 %v1295
        %1360 = vmatmul.bf16.gmra.mxu0 %v1310
        %v1361 = vpop.f32.mrf.mxu0
        %v1362 = vadd.f32 0.0, %v1361
        %v1363 = vpop.f32.mrf.mxu0
        %v1364 = vadd.f32 0.0, %v1363
        %1365 = vmatmul.bf16.gmra.mxu0 %v1313
        %v1366 = vpop.f32.mrf.mxu0
        %v1367 = vadd.f32 0.0, %v1366
        %v1368 = vpop.f32.mrf.mxu0
        %v1369 = vadd.f32 0.0, %v1368
        %1370 = vmatmul.bf16.gmra.mxu0 %v1316
        %v1371 = vpop.f32.mrf.mxu0
        %v1372 = vadd.f32 0.0, %v1371
        %v1373 = vpop.f32.mrf.mxu0
        %v1374 = vadd.f32 0.0, %v1373
        %1375 = vmatmul.bf16.gmra.mxu0 %v1319
        %v1376 = vpop.f32.mrf.mxu0
        %v1377 = vadd.f32 0.0, %v1376
        %v1378 = vpop.f32.mrf.mxu0
        %v1379 = vadd.f32 0.0, %v1378
        %1380 = vmatmul.bf16.gmra.mxu0 %v1322
        %v1381 = vpop.f32.mrf.mxu0
        %v1382 = vadd.f32 0.0, %v1381
        %v1383 = vpop.f32.mrf.mxu0
        %v1384 = vadd.f32 0.0, %v1383
        %1385 = vmatmul.bf16.gmra.mxu0 %v1325
        %v1386 = vpop.f32.mrf.mxu0
        %v1387 = vadd.f32 0.0, %v1386
        %v1388 = vpop.f32.mrf.mxu0
        %v1389 = vadd.f32 0.0, %v1388
        %1390 = vmatmul.bf16.gmra.mxu0 %v1328
        %v1391 = vpop.f32.mrf.mxu0
        %v1392 = vadd.f32 0.0, %v1391
        %v1393 = vpop.f32.mrf.mxu0
        %v1394 = vadd.f32 0.0, %v1393
        %1395 = vmatmul.bf16.gmra.mxu0 %v1331
        %v1396 = vpop.f32.mrf.mxu0
        %v1397 = vadd.f32 0.0, %v1396
        %v1398 = vpop.f32.mrf.mxu0
        %v1399 = vadd.f32 0.0, %v1398
        %1400 = vmatmul.bf16.gmra.mxu0 %v1334
        %v1401 = vpop.f32.mrf.mxu0
        %v1402 = vadd.f32 0.0, %v1401
        %v1403 = vpop.f32.mrf.mxu0
        %v1404 = vadd.f32 0.0, %v1403
        %1405 = vmatmul.bf16.gmra.mxu0 %v1337
        %v1406 = vpop.f32.mrf.mxu0
        %v1407 = vadd.f32 0.0, %v1406
        %v1408 = vpop.f32.mrf.mxu0
        %v1409 = vadd.f32 0.0, %v1408
        %1410 = vmatmul.bf16.gmra.mxu0 %v1340
        %v1411 = vpop.f32.mrf.mxu0
        %v1412 = vadd.f32 0.0, %v1411
        %v1413 = vpop.f32.mrf.mxu0
        %v1414 = vadd.f32 0.0, %v1413
        %1415 = vmatmul.bf16.gmra.mxu0 %v1343
        %v1416 = vpop.f32.mrf.mxu0
        %v1417 = vadd.f32 0.0, %v1416
        %v1418 = vpop.f32.mrf.mxu0
        %v1419 = vadd.f32 0.0, %v1418
        %1420 = vmatmul.bf16.gmra.mxu0 %v1346
        %v1421 = vpop.f32.mrf.mxu0
        %v1422 = vadd.f32 0.0, %v1421
        %v1423 = vpop.f32.mrf.mxu0
        %v1424 = vadd.f32 0.0, %v1423
        %1425 = vdwg.mxu0
        %1452 = vrot.lane.b32.xlu0 %v1362, 76
        %v1453 = vpop.permute.xlu0 %1452
        %1454 = vrot.lane.b32.xlu0 %v1364, 76
        %v1455 = vpop.permute.xlu0 %1454
        %1456 = vrot.lane.b32.xlu0 %v1367, 76
        %v1457 = vpop.permute.xlu0 %1456
        %1458 = vrot.lane.b32.xlu0 %v1369, 76
        %v1459 = vpop.permute.xlu0 %1458
        %1460 = vrot.lane.b32.xlu0 %v1372, 76
        %v1461 = vpop.permute.xlu0 %1460
        %1462 = vrot.lane.b32.xlu0 %v1374, 76
        %v1463 = vpop.permute.xlu0 %1462
        %1464 = vrot.lane.b32.xlu0 %v1377, 76
        %v1465 = vpop.permute.xlu0 %1464
        %1466 = vrot.lane.b32.xlu0 %v1379, 76
        %v1467 = vpop.permute.xlu0 %1466
        %1468 = vrot.lane.b32.xlu0 %v1382, 76
        %v1469 = vpop.permute.xlu0 %1468
        %1470 = vrot.lane.b32.xlu0 %v1384, 76
        %v1471 = vpop.permute.xlu0 %1470
        %1472 = vrot.lane.b32.xlu0 %v1387, 76
        %v1473 = vpop.permute.xlu0 %1472
        %1474 = vrot.lane.b32.xlu0 %v1389, 76
        %v1475 = vpop.permute.xlu0 %1474
        %1476 = vrot.lane.b32.xlu0 %v1392, 76
        %v1477 = vpop.permute.xlu0 %1476
        %1478 = vrot.lane.b32.xlu0 %v1394, 76
        %v1479 = vpop.permute.xlu0 %1478
        %1480 = vrot.lane.b32.xlu0 %v1397, 76
        %v1481 = vpop.permute.xlu0 %1480
        %1482 = vrot.lane.b32.xlu0 %v1399, 76
        %v1483 = vpop.permute.xlu0 %1482
        %1484 = vrot.lane.b32.xlu0 %v1402, 76
        %v1485 = vpop.permute.xlu0 %1484
        %1486 = vrot.lane.b32.xlu0 %v1404, 76
        %v1487 = vpop.permute.xlu0 %1486
        %1488 = vrot.lane.b32.xlu0 %v1407, 76
        %v1489 = vpop.permute.xlu0 %1488
        %1490 = vrot.lane.b32.xlu0 %v1409, 76
        %v1491 = vpop.permute.xlu0 %1490
        %1492 = vrot.lane.b32.xlu0 %v1412, 76
        %v1493 = vpop.permute.xlu0 %1492
        %1494 = vrot.lane.b32.xlu0 %v1414, 76
        %v1495 = vpop.permute.xlu0 %1494
        %1496 = vrot.lane.b32.xlu0 %v1417, 76
        %v1497 = vpop.permute.xlu0 %1496
        %1498 = vrot.lane.b32.xlu0 %v1419, 76
        %v1499 = vpop.permute.xlu0 %1498
        %1500 = vrot.lane.b32.xlu0 %v1422, 76
        %v1501 = vpop.permute.xlu0 %1500
        %1502 = vrot.lane.b32.xlu0 %v1424, 76
        %v1503 = vpop.permute.xlu0 %1502
        %v1530 = vmax.f32 %v1362, %v1453
        %v1531 = vmax.f32 %v1364, %v1455
        %v1532 = vmax.f32 %v1367, %v1457
        %v1533 = vmax.f32 %v1369, %v1459
        %v1534 = vmax.f32 %v1372, %v1461
        %v1535 = vmax.f32 %v1374, %v1463
        %v1536 = vmax.f32 %v1377, %v1465
        %v1537 = vmax.f32 %v1379, %v1467
        %v1538 = vmax.f32 %v1382, %v1469
        %v1539 = vmax.f32 %v1384, %v1471
        %v1540 = vmax.f32 %v1387, %v1473
        %v1541 = vmax.f32 %v1389, %v1475
        %v1542 = vmax.f32 %v1392, %v1477
        %v1543 = vmax.f32 %v1394, %v1479
        %v1544 = vmax.f32 %v1397, %v1481
        %v1545 = vmax.f32 %v1399, %v1483
        %v1546 = vmax.f32 %v1402, %v1485
        %v1547 = vmax.f32 %v1404, %v1487
        %v1548 = vmax.f32 %v1407, %v1489
        %v1549 = vmax.f32 %v1409, %v1491
        %v1550 = vmax.f32 %v1412, %v1493
        %v1551 = vmax.f32 %v1414, %v1495
        %v1552 = vmax.f32 %v1417, %v1497
        %v1553 = vmax.f32 %v1419, %v1499
        %v1554 = vmax.f32 %v1422, %v1501
        %v1555 = vmax.f32 %v1424, %v1503
        %v1556 = vpack.c.bf16 %v1530, %v1530
        %v1557 = vpack.c.bf16 %v1531, %v1531
        %v1558 = vpack.c.bf16 %v1532, %v1532
        %v1559 = vpack.c.bf16 %v1533, %v1533
        %v1560 = vpack.c.bf16 %v1534, %v1534
        %v1561 = vpack.c.bf16 %v1535, %v1535
        %v1562 = vpack.c.bf16 %v1536, %v1536
        %v1563 = vpack.c.bf16 %v1537, %v1537
        %v1564 = vpack.c.bf16 %v1538, %v1538
        %v1565 = vpack.c.bf16 %v1539, %v1539
        %v1566 = vpack.c.bf16 %v1540, %v1540
        %v1567 = vpack.c.bf16 %v1541, %v1541
        %v1568 = vpack.c.bf16 %v1542, %v1542
        %v1569 = vpack.c.bf16 %v1543, %v1543
        %v1570 = vpack.c.bf16 %v1544, %v1544
        %v1571 = vpack.c.bf16 %v1545, %v1545
        %v1572 = vpack.c.bf16 %v1546, %v1546
        %v1573 = vpack.c.bf16 %v1547, %v1547
        %v1574 = vpack.c.bf16 %v1548, %v1548
        %v1575 = vpack.c.bf16 %v1549, %v1549
        %v1576 = vpack.c.bf16 %v1550, %v1550
        %v1577 = vpack.c.bf16 %v1551, %v1551
        %v1578 = vpack.c.bf16 %v1552, %v1552
        %v1579 = vpack.c.bf16 %v1553, %v1553
        %v1580 = vpack.c.bf16 %v1554, %v1554
        %v1581 = vpack.c.bf16 %v1555, %v1555
        %v1582 = vld [vmem:[#allocation5 + $0x30] sm:$0xf]
        %v1583 = vld [vmem:[#allocation5 + $0x34] sm:$0xf]
        %v1584 = vld [vmem:[#allocation5 + $0x38] sm:$0xf]
        %v1585 = vld [vmem:[#allocation5 + $0x3c] sm:$0xf]
        %v1586 = vld [vmem:[#allocation5 + $0x40] sm:$0xf]
        %v1587 = vld [vmem:[#allocation5 + $0x44] sm:$0xf]
        %v1588 = vld [vmem:[#allocation5 + $0x48] sm:$0x3]
        %v1589 = vld [vmem:[#allocation5 + $0x4c] sm:$0xf]
        %v1590 = vld [vmem:[#allocation5 + $0x50] sm:$0xf]
        %v1591 = vld [vmem:[#allocation5 + $0x54] sm:$0xf]
        %v1592 = vld [vmem:[#allocation5 + $0x58] sm:$0xf]
        %v1593 = vld [vmem:[#allocation5 + $0x5c] sm:$0xf]
        %v1594 = vld [vmem:[#allocation5 + $0x60] sm:$0xf]
        %v1595 = vld [vmem:[#allocation5 + $0x64] sm:$0x3]
        %v1618 = vunpack.c.l.b16 %v1558
        %v1619 = vunpack.c.l.b16 %v1559
        %v1620 = vunpack.c.l.b16 %v1560
        %v1621 = vunpack.c.l.b16 %v1561
        %v1622 = vunpack.c.l.b16 %v1562
        %v1623 = vunpack.c.l.b16 %v1563
        %v1624 = vunpack.c.l.b16 %v1564
        %v1625 = vunpack.c.l.b16 %v1565
        %v1626 = vunpack.c.l.b16 %v1566
        %v1627 = vunpack.c.l.b16 %v1567
        %v1628 = vunpack.c.l.b16 %v1568
        %v1629 = vunpack.c.l.b16 %v1569
        %v1630 = vunpack.c.l.b16 %v1570
        %v1631 = vunpack.c.l.b16 %v1571
        %v1632 = vunpack.c.l.b16 %v1572
        %v1633 = vunpack.c.l.b16 %v1573
        %v1634 = vunpack.c.l.b16 %v1574
        %v1635 = vunpack.c.l.b16 %v1575
        %v1636 = vunpack.c.l.b16 %v1576
        %v1637 = vunpack.c.l.b16 %v1577
        %v1638 = vunpack.c.l.b16 %v1578
        %v1639 = vunpack.c.l.b16 %v1579
        %v1640 = vpack.c.b16 %v1619, %v1618
        %v1641 = vpack.c.b16 %v1621, %v1620
        %v1642 = vpack.c.b16 %v1623, %v1622
        %v1643 = vpack.c.b16 %v1625, %v1624
        %v1644 = vpack.c.b16 %v1627, %v1626
        %v1645 = vpack.c.b16 %v1629, %v1628
        %v1646 = vpack.c.b16 %v1631, %v1630
        %v1647 = vpack.c.b16 %v1633, %v1632
        %v1648 = vpack.c.b16 %v1635, %v1634
        %v1649 = vpack.c.b16 %v1637, %v1636
        %v1650 = vpack.c.b16 %v1639, %v1638
        %v1658 = vunpack.c.l.b16 %v1589
        %v1659 = vunpack.c.l.b16 %v1590
        %v1660 = vunpack.c.l.b16 %v1591
        %v1661 = vunpack.c.l.b16 %v1592
        %v1662 = vunpack.c.l.b16 %v1593
        %v1663 = vunpack.c.l.b16 %v1594
        %v1664 = vunpack.c.l.b16 %v1595
        %v1665 = vpack.c.b16 %v1659, %v1658
        %v1666 = vpack.c.b16 %v1661, %v1660
        %v1667 = vpack.c.b16 %v1663, %v1662
        %v1668 = vpack.c.b16 %v1664, %v1664
        %vm1672 = vcmask 424960
        %v1674 = vsel %vm1672, %v1640, 0
        %v1677 = vsel %vm1672, %v1641, 0
        %v1680 = vsel %vm1672, %v1642, 0
        %v1683 = vsel %vm1672, %v1643, 0
        %v1686 = vsel %vm1672, %v1644, 0
        %v1689 = vsel %vm1672, %v1645, 0
        %v1692 = vsel %vm1672, %v1646, 0
        %v1695 = vsel %vm1672, %v1647, 0
        %v1698 = vsel %vm1672, %v1648, 0
        %v1701 = vsel %vm1672, %v1649, 0
        %v1704 = vsel %vm1672, %v1650, 0
        %vm1706 = vcmask 1041408
        %v1708 = vsel %vm1706, %v1668, 0
        %1710 = vmatpush.bf16.msra.mxu0 0
        %1711 = vmatpush.bf16.msra.mxu0 0
        %1712 = vmatpush.bf16.msra.mxu0 0
        %1713 = vmatpush.bf16.msra.mxu0 0
        %1714 = vmatpush.bf16.msra.mxu0 %v1708
        %1715 = vmatpush.bf16.msra.mxu0 %v1667
        %1716 = vmatpush.bf16.msra.mxu0 %v1666
        %1717 = vmatpush.bf16.msra.mxu0 %v1665
        %1718 = vmatmul.bf16.gmra.mxu0 %v1674
        %v1719 = vpop.f32.mrf.mxu0
        %v1720 = vadd.f32 0.0, %v1719
        %v1721 = vpop.f32.mrf.mxu0
        %v1722 = vadd.f32 0.0, %v1721
        %1723 = vmatmul.bf16.gmra.mxu0 %v1677
        %v1724 = vpop.f32.mrf.mxu0
        %v1725 = vadd.f32 0.0, %v1724
        %v1726 = vpop.f32.mrf.mxu0
        %v1727 = vadd.f32 0.0, %v1726
        %1728 = vmatmul.bf16.gmra.mxu0 %v1680
        %v1729 = vpop.f32.mrf.mxu0
        %v1730 = vadd.f32 0.0, %v1729
        %v1731 = vpop.f32.mrf.mxu0
        %v1732 = vadd.f32 0.0, %v1731
        %1733 = vmatmul.bf16.gmra.mxu0 %v1683
        %v1734 = vpop.f32.mrf.mxu0
        %v1735 = vadd.f32 0.0, %v1734
        %v1736 = vpop.f32.mrf.mxu0
        %v1737 = vadd.f32 0.0, %v1736
        %1738 = vmatmul.bf16.gmra.mxu0 %v1686
        %v1739 = vpop.f32.mrf.mxu0
        %v1740 = vadd.f32 0.0, %v1739
        %v1741 = vpop.f32.mrf.mxu0
        %v1742 = vadd.f32 0.0, %v1741
        %1743 = vmatmul.bf16.gmra.mxu0 %v1689
        %v1744 = vpop.f32.mrf.mxu0
        %v1745 = vadd.f32 0.0, %v1744
        %v1746 = vpop.f32.mrf.mxu0
        %v1747 = vadd.f32 0.0, %v1746
        %1748 = vmatmul.bf16.gmra.mxu0 %v1692
        %v1749 = vpop.f32.mrf.mxu0
        %v1750 = vadd.f32 0.0, %v1749
        %v1751 = vpop.f32.mrf.mxu0
        %v1752 = vadd.f32 0.0, %v1751
        %1753 = vmatmul.bf16.gmra.mxu0 %v1695
        %v1754 = vpop.f32.mrf.mxu0
        %v1755 = vadd.f32 0.0, %v1754
        %v1756 = vpop.f32.mrf.mxu0
        %v1757 = vadd.f32 0.0, %v1756
        %1758 = vmatmul.bf16.gmra.mxu0 %v1698
        %v1759 = vpop.f32.mrf.mxu0
        %v1760 = vadd.f32 0.0, %v1759
        %v1761 = vpop.f32.mrf.mxu0
        %v1762 = vadd.f32 0.0, %v1761
        %1763 = vmatmul.bf16.gmra.mxu0 %v1701
        %v1764 = vpop.f32.mrf.mxu0
        %v1765 = vadd.f32 0.0, %v1764
        %v1766 = vpop.f32.mrf.mxu0
        %v1767 = vadd.f32 0.0, %v1766
        %1768 = vmatmul.bf16.gmra.mxu0 %v1704
        %v1769 = vpop.f32.mrf.mxu0
        %v1770 = vpop.f32.mrf.mxu0
        %1771 = vdwg.mxu0
        %v1774 = vunpack.c.l.b16 %v1556
        %v1775 = vunpack.c.l.b16 %v1557
        %v1776 = vpack.c.b16 %v1775, %v1774
        %v1784 = vunpack.c.l.b16 %v1582
        %v1785 = vunpack.c.l.b16 %v1583
        %v1786 = vunpack.c.l.b16 %v1584
        %v1787 = vunpack.c.l.b16 %v1585
        %v1788 = vunpack.c.l.b16 %v1586
        %v1789 = vunpack.c.l.b16 %v1587
        %v1790 = vunpack.c.l.b16 %v1588
        %v1791 = vpack.c.b16 %v1785, %v1784
        %v1792 = vpack.c.b16 %v1787, %v1786
        %v1793 = vpack.c.b16 %v1789, %v1788
        %v1794 = vpack.c.b16 %v1790, %v1790
        %v1799 = vsel %vm1672, %v1776, 0
        %v1802 = vsel %vm1706, %v1794, 0
        %1804 = vmatpush.bf16.msra.mxu0 0
        %1805 = vmatpush.bf16.msra.mxu0 0
        %1806 = vmatpush.bf16.msra.mxu0 0
        %1807 = vmatpush.bf16.msra.mxu0 0
        %1808 = vmatpush.bf16.msra.mxu0 %v1802
        %1809 = vmatpush.bf16.msra.mxu0 %v1793
        %1810 = vmatpush.bf16.msra.mxu0 %v1792
        %1811 = vmatpush.bf16.msra.mxu0 %v1791
        %1812 = vmatmul.bf16.gmra.mxu0 %v1799
        %v1813 = vpop.f32.mrf.mxu0
        %v1814 = vadd.f32 %v1720, %v1813
        %v1815 = vpop.f32.mrf.mxu0
        %v1816 = vadd.f32 %v1722, %v1815
        %1817 = vmatmul.bf16.gmra.mxu0 %v1674
        %v1818 = vpop.f32.mrf.mxu0
        %v1819 = vadd.f32 %v1725, %v1818
        %v1820 = vpop.f32.mrf.mxu0
        %v1821 = vadd.f32 %v1727, %v1820
        %1822 = vmatmul.bf16.gmra.mxu0 %v1677
        %v1823 = vpop.f32.mrf.mxu0
        %v1824 = vadd.f32 %v1730, %v1823
        %v1825 = vpop.f32.mrf.mxu0
        %v1826 = vadd.f32 %v1732, %v1825
        %1827 = vmatmul.bf16.gmra.mxu0 %v1680
        %v1828 = vpop.f32.mrf.mxu0
        %v1829 = vadd.f32 %v1735, %v1828
        %v1830 = vpop.f32.mrf.mxu0
        %v1831 = vadd.f32 %v1737, %v1830
        %1832 = vmatmul.bf16.gmra.mxu0 %v1683
        %v1833 = vpop.f32.mrf.mxu0
        %v1834 = vadd.f32 %v1740, %v1833
        %v1835 = vpop.f32.mrf.mxu0
        %v1836 = vadd.f32 %v1742, %v1835
        %1837 = vmatmul.bf16.gmra.mxu0 %v1686
        %v1838 = vpop.f32.mrf.mxu0
        %v1839 = vadd.f32 %v1745, %v1838
        %v1840 = vpop.f32.mrf.mxu0
        %v1841 = vadd.f32 %v1747, %v1840
        %1842 = vmatmul.bf16.gmra.mxu0 %v1689
        %v1843 = vpop.f32.mrf.mxu0
        %v1844 = vadd.f32 %v1750, %v1843
        %v1845 = vpop.f32.mrf.mxu0
        %v1846 = vadd.f32 %v1752, %v1845
        %1847 = vmatmul.bf16.gmra.mxu0 %v1692
        %v1848 = vpop.f32.mrf.mxu0
        %v1849 = vadd.f32 %v1755, %v1848
        %v1850 = vpop.f32.mrf.mxu0
        %v1851 = vadd.f32 %v1757, %v1850
        %1852 = vmatmul.bf16.gmra.mxu0 %v1695
        %v1853 = vpop.f32.mrf.mxu0
        %v1854 = vadd.f32 %v1760, %v1853
        %v1855 = vpop.f32.mrf.mxu0
        %v1856 = vadd.f32 %v1762, %v1855
        %1857 = vmatmul.bf16.gmra.mxu0 %v1698
        %v1858 = vpop.f32.mrf.mxu0
        %v1859 = vadd.f32 %v1765, %v1858
        %v1860 = vpop.f32.mrf.mxu0
        %v1861 = vadd.f32 %v1767, %v1860
        %1862 = vmatmul.bf16.gmra.mxu0 %v1701
        %v1863 = vpop.f32.mrf.mxu0
        %v1864 = vpop.f32.mrf.mxu0
        %1865 = vdwg.mxu0
        %v1866 = vld [vmem:[#allocation5 + $0x68] sm:$0xf]
        %v1867 = vld [vmem:[#allocation5 + $0x6c] sm:$0xf]
        %v1868 = vld [vmem:[#allocation5 + $0x70] sm:$0xf]
        %v1869 = vld [vmem:[#allocation5 + $0x74] sm:$0xf]
        %v1870 = vld [vmem:[#allocation5 + $0x78] sm:$0xf]
        %v1871 = vld [vmem:[#allocation5 + $0x7c] sm:$0xf]
        %v1872 = vld [vmem:[#allocation5 + $0x80] sm:$0x3]
        %v1875 = vunpack.c.l.b16 %v1580
        %v1876 = vunpack.c.l.b16 %v1581
        %v1877 = vpack.c.b16 %v1876, %v1875
        %v1885 = vunpack.c.l.b16 %v1866
        %v1886 = vunpack.c.l.b16 %v1867
        %v1887 = vunpack.c.l.b16 %v1868
        %v1888 = vunpack.c.l.b16 %v1869
        %v1889 = vunpack.c.l.b16 %v1870
        %v1890 = vunpack.c.l.b16 %v1871
        %v1891 = vunpack.c.l.b16 %v1872
        %v1892 = vpack.c.b16 %v1886, %v1885
        %v1893 = vpack.c.b16 %v1888, %v1887
        %v1894 = vpack.c.b16 %v1890, %v1889
        %v1895 = vpack.c.b16 %v1891, %v1891
        %v1900 = vsel %vm1672, %v1877, 0
        %v1903 = vsel %vm1706, %v1895, 0
        %1905 = vmatpush.bf16.msra.mxu0 0
        %1906 = vmatpush.bf16.msra.mxu0 0
        %1907 = vmatpush.bf16.msra.mxu0 0
        %1908 = vmatpush.bf16.msra.mxu0 0
        %1909 = vmatpush.bf16.msra.mxu0 %v1903
        %1910 = vmatpush.bf16.msra.mxu0 %v1894
        %1911 = vmatpush.bf16.msra.mxu0 %v1893
        %1912 = vmatpush.bf16.msra.mxu0 %v1892
        %1913 = vmatmul.bf16.gmra.mxu0 %v1677
        %v1914 = vpop.f32.mrf.mxu0
        %v1915 = vadd.f32 0.0, %v1914
        %v1916 = vpop.f32.mrf.mxu0
        %v1917 = vadd.f32 0.0, %v1916
        %1918 = vmatmul.bf16.gmra.mxu0 %v1680
        %v1919 = vpop.f32.mrf.mxu0
        %v1920 = vadd.f32 0.0, %v1919
        %v1921 = vpop.f32.mrf.mxu0
        %v1922 = vadd.f32 0.0, %v1921
        %1923 = vmatmul.bf16.gmra.mxu0 %v1683
        %v1924 = vpop.f32.mrf.mxu0
        %v1925 = vadd.f32 0.0, %v1924
        %v1926 = vpop.f32.mrf.mxu0
        %v1927 = vadd.f32 0.0, %v1926
        %1928 = vmatmul.bf16.gmra.mxu0 %v1686
        %v1929 = vpop.f32.mrf.mxu0
        %v1930 = vadd.f32 0.0, %v1929
        %v1931 = vpop.f32.mrf.mxu0
        %v1932 = vadd.f32 0.0, %v1931
        %1933 = vmatmul.bf16.gmra.mxu0 %v1689
        %v1934 = vpop.f32.mrf.mxu0
        %v1935 = vadd.f32 0.0, %v1934
        %v1936 = vpop.f32.mrf.mxu0
        %v1937 = vadd.f32 0.0, %v1936
        %1938 = vmatmul.bf16.gmra.mxu0 %v1692
        %v1939 = vpop.f32.mrf.mxu0
        %v1940 = vadd.f32 0.0, %v1939
        %v1941 = vpop.f32.mrf.mxu0
        %v1942 = vadd.f32 0.0, %v1941
        %1943 = vmatmul.bf16.gmra.mxu0 %v1695
        %v1944 = vpop.f32.mrf.mxu0
        %v1945 = vadd.f32 0.0, %v1944
        %v1946 = vpop.f32.mrf.mxu0
        %v1947 = vadd.f32 0.0, %v1946
        %1948 = vmatmul.bf16.gmra.mxu0 %v1698
        %v1949 = vpop.f32.mrf.mxu0
        %v1950 = vadd.f32 0.0, %v1949
        %v1951 = vpop.f32.mrf.mxu0
        %v1952 = vadd.f32 0.0, %v1951
        %1953 = vmatmul.bf16.gmra.mxu0 %v1701
        %v1954 = vpop.f32.mrf.mxu0
        %v1955 = vadd.f32 0.0, %v1954
        %v1956 = vpop.f32.mrf.mxu0
        %v1957 = vadd.f32 0.0, %v1956
        %1958 = vmatmul.bf16.gmra.mxu0 %v1704
        %v1959 = vpop.f32.mrf.mxu0
        %v1960 = vadd.f32 0.0, %v1959
        %v1961 = vpop.f32.mrf.mxu0
        %v1962 = vadd.f32 0.0, %v1961
        %1963 = vmatmul.bf16.gmra.mxu0 %v1900
        %v1964 = vpop.f32.mrf.mxu0
        %v1965 = vpop.f32.mrf.mxu0
        %1966 = vdwg.mxu0
        %v1967 = vadd.f32 %v1814, %v1915
        %v1968 = vadd.f32 %v1816, %v1917
        %v1969 = vadd.f32 %v1819, %v1920
        %v1970 = vadd.f32 %v1821, %v1922
        %v1971 = vadd.f32 %v1824, %v1925
        %v1972 = vadd.f32 %v1826, %v1927
        %v1973 = vadd.f32 %v1829, %v1930
        %v1974 = vadd.f32 %v1831, %v1932
        %v1975 = vadd.f32 %v1834, %v1935
        %v1976 = vadd.f32 %v1836, %v1937
        %v1977 = vadd.f32 %v1839, %v1940
        %v1978 = vadd.f32 %v1841, %v1942
        %v1979 = vadd.f32 %v1844, %v1945
        %v1980 = vadd.f32 %v1846, %v1947
        %v1981 = vadd.f32 %v1849, %v1950
        %v1982 = vadd.f32 %v1851, %v1952
        %v1983 = vadd.f32 %v1854, %v1955
        %v1984 = vadd.f32 %v1856, %v1957
        %v1985 = vadd.f32 %v1859, %v1960
        %v1986 = vadd.f32 %v1861, %v1962
        %v1987 = vld [vmem:[#allocation7 + $0x1] sm:$0x1]
        %v1988 = vperm.slane %v1987, 0
        %v1989 = vadd.f32 %v1967, %v1988
        %v1990 = vadd.f32 %v1968, %v1988
        %v1991 = vadd.f32 %v1969, %v1988
        %v1992 = vadd.f32 %v1970, %v1988
        %v1993 = vadd.f32 %v1971, %v1988
        %v1994 = vadd.f32 %v1972, %v1988
        %v1995 = vadd.f32 %v1973, %v1988
        %v1996 = vadd.f32 %v1974, %v1988
        %v1997 = vadd.f32 %v1975, %v1988
        %v1998 = vadd.f32 %v1976, %v1988
        %v1999 = vadd.f32 %v1977, %v1988
        %v2000 = vadd.f32 %v1978, %v1988
        %v2001 = vadd.f32 %v1979, %v1988
        %v2002 = vadd.f32 %v1980, %v1988
        %v2003 = vadd.f32 %v1981, %v1988
        %v2004 = vadd.f32 %v1982, %v1988
        %v2005 = vadd.f32 %v1983, %v1988
        %v2006 = vadd.f32 %v1984, %v1988
        %v2007 = vadd.f32 %v1985, %v1988
        %v2008 = vadd.f32 %v1986, %v1988
        %v2009 = vmax.f32 %v1989, 0.0
        %v2010 = vmax.f32 %v1990, 0.0
        %v2011 = vmax.f32 %v1991, 0.0
        %v2012 = vmax.f32 %v1992, 0.0
        %v2013 = vmax.f32 %v1993, 0.0
        %v2014 = vmax.f32 %v1994, 0.0
        %v2015 = vmax.f32 %v1995, 0.0
        %v2016 = vmax.f32 %v1996, 0.0
        %v2017 = vmax.f32 %v1997, 0.0
        %v2018 = vmax.f32 %v1998, 0.0
        %v2019 = vmax.f32 %v1999, 0.0
        %v2020 = vmax.f32 %v2000, 0.0
        %v2021 = vmax.f32 %v2001, 0.0
        %v2022 = vmax.f32 %v2002, 0.0
        %v2023 = vmax.f32 %v2003, 0.0
        %v2024 = vmax.f32 %v2004, 0.0
        %v2025 = vmax.f32 %v2005, 0.0
        %v2026 = vmax.f32 %v2006, 0.0
        %v2027 = vmax.f32 %v2007, 0.0
        %v2028 = vmax.f32 %v2008, 0.0
        %v2029 = vmax.f32 %v2009, %v2011
        %v2030 = vmax.f32 %v2010, %v2012
        %v2031 = vmax.f32 %v2013, %v2015
        %v2032 = vmax.f32 %v2014, %v2016
        %v2033 = vmax.f32 %v2017, %v2019
        %v2034 = vmax.f32 %v2018, %v2020
        %v2035 = vmax.f32 %v2021, %v2023
        %v2036 = vmax.f32 %v2022, %v2024
        %v2037 = vmax.f32 %v2025, %v2027
        %v2038 = vmax.f32 %v2026, %v2028
        %v2039 = vpack.c.bf16 %v2030, %v2029
        %v2040 = vpack.c.bf16 %v2032, %v2031
        %v2041 = vpack.c.bf16 %v2034, %v2033
        %v2042 = vpack.c.bf16 %v2036, %v2035
        %v2043 = vpack.c.bf16 %v2038, %v2037
        %v2044 = vld [vmem:[#allocation5 + $0xb8] sm:$0xf]
        %v2045 = vld [vmem:[#allocation5 + $0xbc] sm:$0xf]
        %v2046 = vld [vmem:[#allocation5 + $0xc0] sm:$0xf]
        %v2047 = vld [vmem:[#allocation5 + $0xc4] sm:$0xf]
        %v2048 = vld [vmem:[#allocation5 + $0xc8] sm:$0xf]
        %v2049 = vld [vmem:[#allocation5 + $0xcc] sm:$0xf]
        %v2050 = vld [vmem:[#allocation5 + $0xd0] sm:$0xf]
        %v2051 = vld [vmem:[#allocation5 + $0xd4] sm:$0xf]
        %v2052 = vld [vmem:[#allocation5 + $0xd8] sm:$0xf]
        %v2053 = vld [vmem:[#allocation5 + $0xdc] sm:$0xf]
        %v2054 = vld [vmem:[#allocation5 + $0xe0] sm:$0xf]
        %v2066 = vunpack.c.l.b16 %v2044
        %v2067 = vunpack.c.l.b16 %v2045
        %v2068 = vunpack.c.l.b16 %v2046
        %v2069 = vunpack.c.l.b16 %v2047
        %v2070 = vunpack.c.l.b16 %v2048
        %v2071 = vunpack.c.l.b16 %v2049
        %v2072 = vunpack.c.l.b16 %v2050
        %v2073 = vunpack.c.l.b16 %v2051
        %v2074 = vunpack.c.l.b16 %v2052
        %v2075 = vunpack.c.l.b16 %v2053
        %v2076 = vunpack.c.l.b16 %v2054
        %v2077 = vpack.c.b16 %v2067, %v2066
        %v2078 = vpack.c.b16 %v2069, %v2068
        %v2079 = vpack.c.b16 %v2071, %v2070
        %v2080 = vpack.c.b16 %v2073, %v2072
        %v2081 = vpack.c.b16 %v2075, %v2074
        %v2082 = vpack.c.b16 %v2076, %v2076
        %vm2088 = vcmask 719872
        %v2090 = vsel %vm2088, %v2039, 0
        %v2093 = vsel %vm2088, %v2040, 0
        %v2096 = vsel %vm2088, %v2041, 0
        %v2099 = vsel %vm2088, %v2042, 0
        %v2102 = vsel %vm2088, %v2043, 0
        %v2105 = vsel %vm1348, %v2082, 0
        %2107 = vmatpush.bf16.msra.mxu0 0
        %2108 = vmatpush.bf16.msra.mxu0 0
        %2109 = vmatpush.bf16.msra.mxu0 %v2105
        %2110 = vmatpush.bf16.msra.mxu0 %v2081
        %2111 = vmatpush.bf16.msra.mxu0 %v2080
        %2112 = vmatpush.bf16.msra.mxu0 %v2079
        %2113 = vmatpush.bf16.msra.mxu0 %v2078
        %2114 = vmatpush.bf16.msra.mxu0 %v2077
        %2115 = vmatmul.bf16.gmra.mxu0 %v2090
        %v2116 = vpop.f32.mrf.mxu0
        %v2117 = vadd.f32 0.0, %v2116
        %v2118 = vpop.f32.mrf.mxu0
        %v2119 = vadd.f32 0.0, %v2118
        %2120 = vmatmul.bf16.gmra.mxu0 %v2093
        %v2121 = vpop.f32.mrf.mxu0
        %v2122 = vadd.f32 0.0, %v2121
        %v2123 = vpop.f32.mrf.mxu0
        %v2124 = vadd.f32 0.0, %v2123
        %2125 = vmatmul.bf16.gmra.mxu0 %v2096
        %v2126 = vpop.f32.mrf.mxu0
        %v2127 = vadd.f32 0.0, %v2126
        %v2128 = vpop.f32.mrf.mxu0
        %v2129 = vadd.f32 0.0, %v2128
        %2130 = vmatmul.bf16.gmra.mxu0 %v2099
        %v2131 = vpop.f32.mrf.mxu0
        %v2132 = vadd.f32 0.0, %v2131
        %v2133 = vpop.f32.mrf.mxu0
        %v2134 = vadd.f32 0.0, %v2133
        %2135 = vmatmul.bf16.gmra.mxu0 %v2102
        %v2136 = vpop.f32.mrf.mxu0
        %v2137 = vadd.f32 0.0, %v2136
        %v2138 = vpop.f32.mrf.mxu0
        %v2139 = vadd.f32 0.0, %v2138
        %2140 = vdwg.mxu0
        %2151 = vrot.lane.b32.xlu0 %v2117, 88
        %v2152 = vpop.permute.xlu0 %2151
        %2153 = vrot.lane.b32.xlu0 %v2119, 88
        %v2154 = vpop.permute.xlu0 %2153
        %2155 = vrot.lane.b32.xlu0 %v2122, 88
        %v2156 = vpop.permute.xlu0 %2155
        %2157 = vrot.lane.b32.xlu0 %v2124, 88
        %v2158 = vpop.permute.xlu0 %2157
        %2159 = vrot.lane.b32.xlu0 %v2127, 88
        %v2160 = vpop.permute.xlu0 %2159
        %2161 = vrot.lane.b32.xlu0 %v2129, 88
        %v2162 = vpop.permute.xlu0 %2161
        %2163 = vrot.lane.b32.xlu0 %v2132, 88
        %v2164 = vpop.permute.xlu0 %2163
        %2165 = vrot.lane.b32.xlu0 %v2134, 88
        %v2166 = vpop.permute.xlu0 %2165
        %2167 = vrot.lane.b32.xlu0 %v2137, 88
        %v2168 = vpop.permute.xlu0 %2167
        %2169 = vrot.lane.b32.xlu0 %v2139, 88
        %v2170 = vpop.permute.xlu0 %2169
        %v2181 = vmax.f32 %v2117, %v2152
        %v2182 = vmax.f32 %v2119, %v2154
        %v2183 = vmax.f32 %v2122, %v2156
        %v2184 = vmax.f32 %v2124, %v2158
        %v2185 = vmax.f32 %v2127, %v2160
        %v2186 = vmax.f32 %v2129, %v2162
        %v2187 = vmax.f32 %v2132, %v2164
        %v2188 = vmax.f32 %v2134, %v2166
        %v2189 = vmax.f32 %v2137, %v2168
        %v2190 = vmax.f32 %v2139, %v2170
        %v2191 = vpack.c.bf16 %v2181, %v2181
        %v2192 = vpack.c.bf16 %v2182, %v2182
        %v2193 = vpack.c.bf16 %v2183, %v2183
        %v2194 = vpack.c.bf16 %v2184, %v2184
        %v2195 = vpack.c.bf16 %v2185, %v2185
        %v2196 = vpack.c.bf16 %v2186, %v2186
        %v2197 = vpack.c.bf16 %v2187, %v2187
        %v2198 = vpack.c.bf16 %v2188, %v2188
        %v2199 = vpack.c.bf16 %v2189, %v2189
        %v2200 = vpack.c.bf16 %v2190, %v2190
        %v2201 = vld [vmem:[#allocation5 + $0xe4] sm:$0xf]
        %v2202 = vld [vmem:[#allocation5 + $0xe8] sm:$0xf]
        %v2203 = vld [vmem:[#allocation5 + $0xec] sm:$0xf]
        %v2204 = vld [vmem:[#allocation5 + $0xf0] sm:$0xf]
        %v2205 = vld [vmem:[#allocation5 + $0xf4] sm:$0xf]
        %v2206 = vld [vmem:[#allocation5 + $0xf8] sm:$0xf]
        %v2207 = vld [vmem:[#allocation5 + $0xfc] sm:$0xf]
        %v2208 = vld [vmem:[#allocation5 + $0x100] sm:$0xf]
        %v2209 = vld [vmem:[#allocation5 + $0x104] sm:$0xf]
        %v2210 = vld [vmem:[#allocation5 + $0x108] sm:$0xf]
        %v2213 = vunpack.c.l.b16 %v2193
        %v2214 = vunpack.c.l.b16 %v2194
        %v2215 = vpack.c.b16 %v2214, %v2213
        %v2221 = vunpack.c.l.b16 %v2206
        %v2222 = vunpack.c.l.b16 %v2207
        %v2223 = vunpack.c.l.b16 %v2208
        %v2224 = vunpack.c.l.b16 %v2209
        %v2225 = vunpack.c.l.b16 %v2210
        %v2226 = vpack.c.b16 %v2222, %v2221
        %v2227 = vpack.c.b16 %v2224, %v2223
        %v2228 = vpack.c.b16 %v2225, %v2225
        %vm2231 = vcmask 326656
        %v2233 = vsel %vm2231, %v2215, 0
        %v2236 = vsel %vm1348, %v2228, 0
        %2238 = vmatpush.bf16.msra.mxu0 0
        %2239 = vmatpush.bf16.msra.mxu0 0
        %2240 = vmatpush.bf16.msra.mxu0 0
        %2241 = vmatpush.bf16.msra.mxu0 0
        %2242 = vmatpush.bf16.msra.mxu0 0
        %2243 = vmatpush.bf16.msra.mxu0 %v2236
        %2244 = vmatpush.bf16.msra.mxu0 %v2227
        %2245 = vmatpush.bf16.msra.mxu0 %v2226
        %2246 = vmatmul.bf16.gmra.mxu0 %v2233
        %v2247 = vpop.f32.mrf.mxu0
        %v2248 = vadd.f32 0.0, %v2247
        %v2249 = vpop.f32.mrf.mxu0
        %v2250 = vadd.f32 0.0, %v2249
        %2251 = vdwg.mxu0
        %v2254 = vunpack.c.l.b16 %v2191
        %v2255 = vunpack.c.l.b16 %v2192
        %v2256 = vpack.c.b16 %v2255, %v2254
        %v2262 = vunpack.c.l.b16 %v2201
        %v2263 = vunpack.c.l.b16 %v2202
        %v2264 = vunpack.c.l.b16 %v2203
        %v2265 = vunpack.c.l.b16 %v2204
        %v2266 = vunpack.c.l.b16 %v2205
        %v2267 = vpack.c.b16 %v2263, %v2262
        %v2268 = vpack.c.b16 %v2265, %v2264
        %v2269 = vpack.c.b16 %v2266, %v2266
        %v2273 = vsel %vm2231, %v2256, 0
        %v2276 = vsel %vm1348, %v2269, 0
        %2278 = vmatpush.bf16.msra.mxu0 0
        %2279 = vmatpush.bf16.msra.mxu0 0
        %2280 = vmatpush.bf16.msra.mxu0 0
        %2281 = vmatpush.bf16.msra.mxu0 0
        %2282 = vmatpush.bf16.msra.mxu0 0
        %2283 = vmatpush.bf16.msra.mxu0 %v2276
        %2284 = vmatpush.bf16.msra.mxu0 %v2268
        %2285 = vmatpush.bf16.msra.mxu0 %v2267
        %2286 = vmatmul.bf16.gmra.mxu0 %v2273
        %v2287 = vpop.f32.mrf.mxu0
        %v2288 = vadd.f32 %v2248, %v2287
        %v2289 = vpop.f32.mrf.mxu0
        %v2290 = vadd.f32 %v2250, %v2289
        %2291 = vdwg.mxu0
        %v2292 = vld [vmem:[#allocation5 + $0x10c] sm:$0xf]
        %v2293 = vld [vmem:[#allocation5 + $0x110] sm:$0xf]
        %v2294 = vld [vmem:[#allocation5 + $0x114] sm:$0xf]
        %v2295 = vld [vmem:[#allocation5 + $0x118] sm:$0xf]
        %v2296 = vld [vmem:[#allocation5 + $0x11c] sm:$0xf]
        %v2299 = vunpack.c.l.b16 %v2195
        %v2300 = vunpack.c.l.b16 %v2196
        %v2301 = vpack.c.b16 %v2300, %v2299
        %v2307 = vunpack.c.l.b16 %v2292
        %v2308 = vunpack.c.l.b16 %v2293
        %v2309 = vunpack.c.l.b16 %v2294
        %v2310 = vunpack.c.l.b16 %v2295
        %v2311 = vunpack.c.l.b16 %v2296
        %v2312 = vpack.c.b16 %v2308, %v2307
        %v2313 = vpack.c.b16 %v2310, %v2309
        %v2314 = vpack.c.b16 %v2311, %v2311
        %v2318 = vsel %vm2231, %v2301, 0
        %v2321 = vsel %vm1348, %v2314, 0
        %2323 = vmatpush.bf16.msra.mxu0 0
        %2324 = vmatpush.bf16.msra.mxu0 0
        %2325 = vmatpush.bf16.msra.mxu0 0
        %2326 = vmatpush.bf16.msra.mxu0 0
        %2327 = vmatpush.bf16.msra.mxu0 0
        %2328 = vmatpush.bf16.msra.mxu0 %v2321
        %2329 = vmatpush.bf16.msra.mxu0 %v2313
        %2330 = vmatpush.bf16.msra.mxu0 %v2312
        %2331 = vmatmul.bf16.gmra.mxu0 %v2318
        %v2332 = vpop.f32.mrf.mxu0
        %v2333 = vadd.f32 0.0, %v2332
        %v2334 = vpop.f32.mrf.mxu0
        %v2335 = vadd.f32 0.0, %v2334
        %2336 = vdwg.mxu0
        %v2337 = vadd.f32 %v2288, %v2333
        %v2338 = vadd.f32 %v2290, %v2335
        %v2339 = vld [vmem:[#allocation5 + $0x120] sm:$0xf]
        %v2340 = vld [vmem:[#allocation5 + $0x124] sm:$0xf]
        %v2341 = vld [vmem:[#allocation5 + $0x128] sm:$0xf]
        %v2342 = vld [vmem:[#allocation5 + $0x12c] sm:$0xf]
        %v2343 = vld [vmem:[#allocation5 + $0x130] sm:$0xf]
        %v2346 = vunpack.c.l.b16 %v2197
        %v2347 = vunpack.c.l.b16 %v2198
        %v2348 = vpack.c.b16 %v2347, %v2346
        %v2354 = vunpack.c.l.b16 %v2339
        %v2355 = vunpack.c.l.b16 %v2340
        %v2356 = vunpack.c.l.b16 %v2341
        %v2357 = vunpack.c.l.b16 %v2342
        %v2358 = vunpack.c.l.b16 %v2343
        %v2359 = vpack.c.b16 %v2355, %v2354
        %v2360 = vpack.c.b16 %v2357, %v2356
        %v2361 = vpack.c.b16 %v2358, %v2358
        %v2365 = vsel %vm2231, %v2348, 0
        %v2368 = vsel %vm1348, %v2361, 0
        %2370 = vmatpush.bf16.msra.mxu0 0
        %2371 = vmatpush.bf16.msra.mxu0 0
        %2372 = vmatpush.bf16.msra.mxu0 0
        %2373 = vmatpush.bf16.msra.mxu0 0
        %2374 = vmatpush.bf16.msra.mxu0 0
        %2375 = vmatpush.bf16.msra.mxu0 %v2368
        %2376 = vmatpush.bf16.msra.mxu0 %v2360
        %2377 = vmatpush.bf16.msra.mxu0 %v2359
        %2378 = vmatmul.bf16.gmra.mxu0 %v2365
        %v2379 = vpop.f32.mrf.mxu0
        %v2380 = vadd.f32 0.0, %v2379
        %v2381 = vpop.f32.mrf.mxu0
        %v2382 = vadd.f32 0.0, %v2381
        %2383 = vdwg.mxu0
        %v2384 = vadd.f32 %v2337, %v2380
        %v2385 = vadd.f32 %v2338, %v2382
        %v2386 = vld [vmem:[#allocation5 + $0x134] sm:$0xf]
        %v2387 = vld [vmem:[#allocation5 + $0x138] sm:$0xf]
        %v2388 = vld [vmem:[#allocation5 + $0x13c] sm:$0xf]
        %v2389 = vld [vmem:[#allocation5 + $0x140] sm:$0xf]
        %v2390 = vld [vmem:[#allocation5 + $0x144] sm:$0xf]
        %v2393 = vunpack.c.l.b16 %v2199
        %v2394 = vunpack.c.l.b16 %v2200
        %v2395 = vpack.c.b16 %v2394, %v2393
        %v2401 = vunpack.c.l.b16 %v2386
        %v2402 = vunpack.c.l.b16 %v2387
        %v2403 = vunpack.c.l.b16 %v2388
        %v2404 = vunpack.c.l.b16 %v2389
        %v2405 = vunpack.c.l.b16 %v2390
        %v2406 = vpack.c.b16 %v2402, %v2401
        %v2407 = vpack.c.b16 %v2404, %v2403
        %v2408 = vpack.c.b16 %v2405, %v2405
        %v2412 = vsel %vm2231, %v2395, 0
        %v2415 = vsel %vm1348, %v2408, 0
        %2417 = vmatpush.bf16.msra.mxu0 0
        %2418 = vmatpush.bf16.msra.mxu0 0
        %2419 = vmatpush.bf16.msra.mxu0 0
        %2420 = vmatpush.bf16.msra.mxu0 0
        %2421 = vmatpush.bf16.msra.mxu0 0
        %2422 = vmatpush.bf16.msra.mxu0 %v2415
        %2423 = vmatpush.bf16.msra.mxu0 %v2407
        %2424 = vmatpush.bf16.msra.mxu0 %v2406
        %2425 = vmatmul.bf16.gmra.mxu0 %v2412
        %v2426 = vpop.f32.mrf.mxu0
        %v2427 = vadd.f32 0.0, %v2426
        %v2428 = vpop.f32.mrf.mxu0
        %v2429 = vadd.f32 0.0, %v2428
        %2430 = vdwg.mxu0
        %v2431 = vadd.f32 %v2384, %v2427
        %v2432 = vadd.f32 %v2385, %v2429
        %v2433 = vld [vmem:[#allocation7 + $0x2] sm:$0x1]
        %v2434 = vperm.slane %v2433, 0
        %v2435 = vadd.f32 %v2431, %v2434
        %v2436 = vadd.f32 %v2432, %v2434
        %v2437 = vmax.f32 %v2435, 0.0
        %v2438 = vmax.f32 %v2436, 0.0
        %v2439 = vpack.c.bf16 %v2438, %v2437
        %v2440 = vld [vmem:[#allocation5 + $0x148] sm:$0xf]
        %v2441 = vld [vmem:[#allocation5 + $0x14c] sm:$0xf]
        %v2442 = vld [vmem:[#allocation5 + $0x150] sm:$0xf]
        %v2443 = vld [vmem:[#allocation5 + $0x154] sm:$0xf]
        %v2444 = vld [vmem:[#allocation7 + $0x3] sm:$0x1]
        %v2445 = vperm.slane %v2444, 0
        %v2450 = vunpack.c.l.b16 %v2440
        %v2451 = vunpack.c.l.b16 %v2441
        %v2452 = vunpack.c.l.b16 %v2442
        %v2453 = vunpack.c.l.b16 %v2443
        %v2454 = vpack.c.b16 %v2451, %v2450
        %v2455 = vpack.c.b16 %v2453, %v2452
        %vm2458 = vcmask 261120
        %v2460 = vsel %vm2458, %v2439, 0
        %2462 = vmatpush.bf16.msra.mxu0 0
        %2463 = vmatpush.bf16.msra.mxu0 0
        %2464 = vmatpush.bf16.msra.mxu0 0
        %2465 = vmatpush.bf16.msra.mxu0 0
        %2466 = vmatpush.bf16.msra.mxu0 0
        %2467 = vmatpush.bf16.msra.mxu0 0
        %2468 = vmatpush.bf16.msra.mxu0 %v2455
        %2469 = vmatpush.bf16.msra.mxu0 %v2454
        %2470 = vmatmul.bf16.gmra.mxu0 %v2460
        %v2471 = vpop.f32.mrf.mxu0
        %v2472 = vadd.f32 %v2445, %v2471
        %v2473 = vpop.f32.mrf.mxu0
        %v2474 = vadd.f32 %v2445, %v2473
        %2475 = vdwg.mxu0
        %2476 = vmax.xlane.f32.xlu0 %v2472
        %v2477 = vpop.xlane.xlu0 %2476
        %2478 = vmax.xlane.f32.xlu0 %v2474
        %v2479 = vpop.xlane.xlu0 %2478
        %v2480 = vsub.f32 %v2472, %v2477
        %v2481 = vsub.f32 %v2474, %v2479
        %v2482 = vmul.f32 %v2480, 1.442695
        %v2483 = vpow.pop %v2482
        %v2484 = vmul.f32 %v2481, 1.442695
        %v2485 = vpow.pop %v2484
        %2486 = vadd.xlane.f32.xlu0 %v2483
        %v2487 = vpop.xlane.xlu0 %2486
        %2488 = vadd.xlane.f32.xlu0 %v2485
        %v2489 = vpop.xlane.xlu0 %2488
        %v2490 = vlog2.pop %v2487
        %v2491 = vmul.f32 %v2490, 0.6931472
        %v2492 = vlog2.pop %v2489
        %v2493 = vmul.f32 %v2492, 0.6931472
        %v2494 = vsub.f32 %v2480, %v2491
        %v2495 = vsub.f32 %v2481, %v2493
        %2496 = vst [vmem:[%s246] sm:$0xff] %v2494
        %2497 = vst [vmem:[%s246 + $0x8] sm:$0xff] %v2495
        %s2498 = sand.u32 %s97, 1
        %s2499 = scalar_lea.sflag [#allocation4], %s2498
        %s2500 = sand.u32 %s97, 1
        %s2501 = smul.addr %s2500, 16
        %s2502 = scalar_lea.vmem [#allocation8], %s2501
        // Predicated region
        $region45: #{tpu_custom_call.1} parent=31 // pred_check
          %p2503 = pneg %p107
        $region46: #{tpu_custom_call.1} parent=31 // pred_check_branch
          %2505 = sbr.rel (%p2503) target = $region48
        $region47: #{tpu_custom_call.1} parent=31 // pred_region
          %s2506 = smul.u32 2, %s21
          %2508 = vsyncadd %s2499, 0
          %s2509 = smul.addr %s2506, 8
          %s2510 = scalar_lea.hbm %s3, %s2509
          %s2511 = sshll.u32 %s2502, 4
          %s2512 = int_to_ptr.vmem [resolvable:$true] %s2511
          %s2513 = sshll.u32 %s2510, 4
          %s2514 = int_to_ptr.hbm [resolvable:$true] %s2513
          %2519 = dma.vmem_to_hbm [thread:$0]  %s2512, 256, %s2514, %s2499, 128, 128, 8
        $region48: #{tpu_custom_call.1} parent=31 // pred_fallthru
          _
      $region32: #{tpu_custom_call.1} parent=5 // pred_fallthru
        _
      %p2520 = scmp.le.s32.totalorder 2, %s16
      // Predicated region
      $region49: #{tpu_custom_call.1} parent=5 // pred_check
        %p2521 = pneg %p2520
      $region50: #{tpu_custom_call.1} parent=5 // pred_check_branch
        %2523 = sbr.rel (%p2521) target = $region52
      $region51: #{tpu_custom_call.1} parent=5 // pred_region
        %s2524 = ssub.s32 %s16, 2
        // Predicated region
        $region53: #{tpu_custom_call.1} parent=51 // pred_check
          %p2525 = pneg %p113
        $region54: #{tpu_custom_call.1} parent=51 // pred_check_branch
          %2527 = sbr.rel (%p2525) target = $region56
        $region55: #{tpu_custom_call.1} parent=51 // pred_region
          %s2528 = sand.u32 %s98, 1
          %s2529 = scalar_lea.sflag [#allocation4], %s2528
          %s2530 = sand.u32 %s98, 1
          %s2531 = smul.addr %s2530, 16
          %s2532 = scalar_lea.vmem [#allocation8], %s2531
          %2534 = dma.done %s2529, 256
        $region56: #{tpu_custom_call.1} parent=51 // pred_fallthru
          _
      $region52: #{tpu_custom_call.1} parent=5 // pred_fallthru
        _
    $region6: #{tpu_custom_call.1} parent=1 // loop_footer
      %s20 = sadd.s32 1, %s16
    $region7: #{tpu_custom_call.1} parent=1 // loop_footer_branch
      %15 = sbr.rel target = $region3
    $region8: #{tpu_custom_call.1} parent=1 // loop_exit
      _
    %2535 = vsyncpa [#allocation3], 1
    %s2536 = scalar_lea.sflag [#allocation3], 1
    %2537 = vsyncpa %s2536, 1
    %2538 = vsyncpa [#allocation6], 1
    %2539 = vsyncpa [#allocation4], 1
    %s2540 = scalar_lea.sflag [#allocation4], 1
    %2541 = vsyncpa %s2540, 1

</llo_original>
